<compile_context>
chip_gen: v6e
topology: v6e:2x2x1
jax: 0.10.0
libtpu: 0.0.40
codegen_flags: <defaults>
</compile_context>

<pallas_src>
import functools

import jax
import jax.numpy as jnp
from jax import lax
from jax.experimental import pallas as pl
from jax.experimental.pallas import tpu as pltpu


# ----------------------------------------------------------------------------
# Fused kernel
# ----------------------------------------------------------------------------

def _basic_block_kernel(x_ref, w1_ref, w2_ref, pool_ref,
                        g1_ref, b1_ref, g2_ref, b2_ref,
                        o_ref, pad_ref, *, n, h, wc, eps, compute_dtype):
    """All refs are full-array VMEM blocks (single grid step).

    x_ref, o_ref : (n, h, wc) f32 lane-dense activations (wc = W*C).
    w1_ref,w2_ref: (3, wc, wc) banded conv weights in compute_dtype; block kh
                   folds the kw taps, the Cin contraction and the W
                   zero-padding into one (wc, wc) matmul operand.
    pool_ref     : (wc, wc) f32, pool[i, j] = (i % C == j % C) / (N*H*W);
                   right-multiplying per-(w, c) column sums gives per-channel
                   batch means broadcast back across W.
    g*/b*_ref    : (1, wc) f32 BN gamma/beta pre-tiled across W.
    pad_ref      : (n, h+2, wc) compute_dtype VMEM scratch; rows 0 and h+1 of
                   every image stay zero -> H zero-padding for both convs.
    """
    nh = n * h

    # H padding scratch in the matmul dtype: zero once, write the interior.
    # The border rows are never overwritten, so the same scratch serves both
    # convolutions; the f32->compute_dtype cast happens once per conv input.
    pad_ref[...] = jnp.zeros((n, h + 2, wc), compute_dtype)
    pad_ref[:, 1:h + 1, :] = x_ref[...].astype(compute_dtype)

    def conv3x3(w_ref):
        # Three accumulating kh dots, K = wc = 128 each (MXU-aligned), instead
        # of materializing a (nh, 3*wc) lane-concat buffer + one K=3*wc dot.
        acc = jnp.zeros((nh, wc), jnp.float32)
        for kh in range(3):                               # static unroll
            taps = pad_ref[:, kh:kh + h, :].reshape(nh, wc)
            acc = acc + jnp.dot(taps, w_ref[kh],
                                preferred_element_type=jnp.float32)
        return acc                                        # (nh, wc) f32

    def batchnorm(y, gamma, beta):
        # Training-mode batch statistics (biased variance) per channel.
        # One pooling dot for both moments: row 0 -> E[y], row 1 -> E[y^2].
        s1 = jnp.sum(y, axis=0, keepdims=True)            # (1, wc)
        s2 = jnp.sum(y * y, axis=0, keepdims=True)        # (1, wc)
        moments = jnp.dot(jnp.concatenate([s1, s2], axis=0), pool_ref[...],
                          preferred_element_type=jnp.float32)   # (2, wc)
        mean = moments[0:1, :]
        var = moments[1:2, :] - mean * mean
        return (y - mean) * (gamma * lax.rsqrt(var + eps)) + beta

    # conv1 -> bn1 -> relu
    y = jnp.maximum(
        batchnorm(conv3x3(w1_ref), g1_ref[...], b1_ref[...]), 0.0)

    # conv2 -> bn2 -> + identity -> relu   (stride=1, downsample=None)
    pad_ref[:, 1:h + 1, :] = y.reshape(n, h, wc).astype(compute_dtype)
    z = batchnorm(conv3x3(w2_ref), g2_ref[...], b2_ref[...])
    z = z + x_ref[...].reshape(nh, wc)
    o_ref[...] = jnp.maximum(z, 0.0).reshape(n, h, wc)


# ----------------------------------------------------------------------------
# Parameter preparation (glue, runs once per set of weights)
# ----------------------------------------------------------------------------

def _banded_conv_weight(w_oihw, w_dim, dtype):
    """PyTorch OIHW (Cout, Cin, 3, 3) -> (3, W*Cin, W*Cout) banded operands.

    Block kh holds M_kh with
      M_kh[w_in*Cin + ci, w_out*Cout + co] = weight[co, ci, kh, w_in - w_out + 1]
    when w_in - w_out + 1 in {0, 1, 2}, else 0 (which also encodes the W
    zero-padding of the 'same' convolution).
    """
    c_out, c_in, k_h, k_w = w_oihw.shape
    w_hwio = jnp.transpose(w_oihw, (2, 3, 1, 0)).astype(jnp.float32)
    blocks = []
    for kh in range(k_h):
        m = jnp.zeros((w_dim * c_in, w_dim * c_out), jnp.float32)
        for kw in range(k_w):
            band = jnp.eye(w_dim, k=1 - kw, dtype=jnp.float32)
            m = m + jnp.kron(band, w_hwio[kh, kw])
        blocks.append(m)
    return jnp.stack(blocks, axis=0).astype(dtype)


def _channel_pool_matrix(w_dim, c, count):
    idx = jnp.arange(w_dim * c)
    same_channel = (idx[:, None] % c) == (idx[None, :] % c)
    return same_channel.astype(jnp.float32) / float(count)


def _tile_over_w(v, w_dim):
    return jnp.tile(v.astype(jnp.float32), w_dim).reshape(1, -1)


# ----------------------------------------------------------------------------
# BasicBlock wrappers
# ----------------------------------------------------------------------------

def basic_block_nhwc(x_nhwc, w1_oihw, g1, b1, w2_oihw, g2, b2,
                     eps=1e-5, matmul_dtype=jnp.bfloat16):
    """NHWC-native fused BasicBlock (no layout ops around the kernel)."""
    n, h, w, c = x_nhwc.shape
    wc = w * c

    x_lane = x_nhwc.reshape(n, h, wc).astype(jnp.float32)       # lane-dense
    w1b = _banded_conv_weight(w1_oihw, w, matmul_dtype)
    w2b = _banded_conv_weight(w2_oihw, w, matmul_dtype)
    pool = _channel_pool_matrix(w, c, n * h * w)
    g1l, b1l = _tile_over_w(g1, w), _tile_over_w(b1, w)
    g2l, b2l = _tile_over_w(g2, w), _tile_over_w(b2, w)

    def full_spec(shape):
        return pl.BlockSpec(shape, lambda i, _s=shape: (0,) * len(_s))

    # Advisory cost from the TRUE conv FLOPs / bytes, not the banded-matmul
    # inflated count, so XLA weights this kernel sensibly in a full network.
    itemsize = jnp.dtype(matmul_dtype).itemsize
    conv_flops = 2 * 2 * n * h * w * c * 9 * c        # two 3x3 convs, 2*MACs
    elem_flops = 12 * n * h * w * c                   # BN apply + relu + add
    cost = pl.CostEstimate(
        flops=conv_flops + elem_flops,
        transcendentals=2 * wc,                       # two per-channel rsqrt
        bytes_accessed=(2 * n * h * wc * 4            # x in + out (f32)
                        + 2 * 9 * c * c * itemsize    # true conv weights
                        + 4 * wc * 4))                # BN gamma/beta

    kernel = functools.partial(_basic_block_kernel, n=n, h=h, wc=wc,
                               eps=eps, compute_dtype=matmul_dtype)
    out_lane = pl.pallas_call(
        kernel,
        out_shape=jax.ShapeDtypeStruct((n, h, wc), jnp.float32),
        grid=(1,),   # whole block fits in VMEM here; BN stats need all of it
        in_specs=[
            full_spec((n, h, wc)),            # x (lane-dense, f32)
            full_spec((3, wc, wc)),           # banded conv1 weight
            full_spec((3, wc, wc)),           # banded conv2 weight
            full_spec((wc, wc)),              # channel-pooling matrix
            full_spec((1, wc)), full_spec((1, wc)),   # gamma1, beta1
            full_spec((1, wc)), full_spec((1, wc)),   # gamma2, beta2
        ],
        out_specs=full_spec((n, h, wc)),
        scratch_shapes=[pltpu.VMEM((n, h + 2, wc), matmul_dtype)],
        compiler_params=pltpu.CompilerParams(
            dimension_semantics=("arbitrary",)),
        cost_estimate=cost,
    )(x_lane, w1b, w2b, pool, g1l, b1l, g2l, b2l)

    return out_lane.reshape(n, h, w, c)


def basic_block_nchw(x_nchw, w1, g1, b1, w2, g2, b2,
                     eps=1e-5, matmul_dtype=jnp.bfloat16):
    # Layout glue only: the PyTorch module is NCHW, the kernel is NHWC /
    # lane-dense.  In a full network this transpose lives at the model
    # boundary, not between blocks.
    x_nhwc = jnp.transpose(x_nchw, (0, 2, 3, 1))
    out = basic_block_nhwc(x_nhwc, w1, g1, b1, w2, g2, b2, eps, matmul_dtype)
    return jnp.transpose(out, (0, 3, 1, 2))


# ----------------------------------------------------------------------------
# Pure-JAX reference (PyTorch semantics: train-mode BN, eps=1e-5)
# ----------------------------------------------------------------------------

def basic_block_reference(x, w1, g1, b1, w2, g2, b2, eps=1e-5):
    def conv(x_, w_):
        return lax.conv_general_dilated(
            x_, w_, window_strides=(1, 1), padding=[(1, 1), (1, 1)],
            dimension_numbers=("NCHW", "OIHW", "NCHW"),
            precision=lax.Precision.HIGHEST)

    def bn(x_, g_, b_):
        mean = jnp.mean(x_, axis=(0, 2, 3), keepdims=True)
        var = jnp.mean(jnp.square(x_ - mean), axis=(0, 2, 3), keepdims=True)
        return ((x_ - mean) * lax.rsqrt(var + eps) * g_.reshape(1, -1, 1, 1)
                + b_.reshape(1, -1, 1, 1))

    out = jax.nn.relu(bn(conv(x, w1), g1, b1))
    out = bn(conv(out, w2), g2, b2) + x
    return jax.nn.relu(out)


# ----------------------------------------------------------------------------
# main
# ----------------------------------------------------------------------------

if __name__ == "__main__":
    # W * C = 128 -> lane-dense last dim; N * H = 128 -> full MXU rows (v5e).
    N, C, H, W = 8, 8, 16, 16
    key = jax.random.PRNGKey(0)
    kx, k1, k2, kg1, kb1, kg2, kb2 = jax.random.split(key, 7)

    x = jax.random.normal(kx, (N, C, H, W), dtype=jnp.float32)
    # conv weights in PyTorch OIHW layout (out_ch, in_ch, 3, 3), bias=False
    w1 = 0.1 * jax.random.normal(k1, (C, C, 3, 3), dtype=jnp.float32)
    w2 = 0.1 * jax.random.normal(k2, (C, C, 3, 3), dtype=jnp.float32)
    # BatchNorm affine params (deterministic, non-trivial)
    g1 = 1.0 + 0.1 * jax.random.normal(kg1, (C,), dtype=jnp.float32)
    b1 = 0.1 * jax.random.normal(kb1, (C,), dtype=jnp.float32)
    g2 = 1.0 + 0.1 * jax.random.normal(kg2, (C,), dtype=jnp.float32)
    b2 = 0.1 * jax.random.normal(kb2, (C,), dtype=jnp.float32)

    ref = basic_block_reference(x, w1, g1, b1, w2, g2, b2)

    # f32 MXU path: structural check of the fused kernel (f32 matmul on
    # v6e/v7x is a multi-pass bf16 emulation, hence the 1e-2 tolerance).
    fwd_f32 = jax.jit(functools.partial(basic_block_nchw,
                                        matmul_dtype=jnp.float32))
    out_f32 = jax.block_until_ready(fwd_f32(x, w1, g1, b1, w2, g2, b2))
    assert out_f32.shape == (N, C, H, W) and out_f32.dtype == jnp.float32
    assert jnp.allclose(out_f32, ref, rtol=1e-2, atol=1e-2), (
        f"f32 path max abs err = {jnp.max(jnp.abs(out_f32 - ref))}")

    # bf16 MXU path (default): bf16 operand rounding through two conv+BN
    # stages gives up to ~1e-2-scale deviations vs the f32 reference.
    fwd_bf16 = jax.jit(basic_block_nchw)          # matmul_dtype defaults bf16
    out_bf16 = jax.block_until_ready(fwd_bf16(x, w1, g1, b1, w2, g2, b2))
    assert out_bf16.shape == (N, C, H, W) and out_bf16.dtype == jnp.float32
    assert jnp.allclose(out_bf16, ref, rtol=3e-2, atol=3e-2), (
        f"bf16 path max abs err = {jnp.max(jnp.abs(out_bf16 - ref))}")

    print("KERNEL_OK")
</pallas_src>

<mosaic_0001>
module attributes {stable_mosaic.version = 11 : i64} {
  func.func @_basic_block_kernel(%arg0: i32, %arg1: memref<8x16x128xf32, #tpu.memory_space<vmem>>, %arg2: memref<3x128x128xf32, #tpu.memory_space<vmem>>, %arg3: memref<3x128x128xf32, #tpu.memory_space<vmem>>, %arg4: memref<128x128xf32, #tpu.memory_space<vmem>>, %arg5: memref<1x128xf32, #tpu.memory_space<vmem>>, %arg6: memref<1x128xf32, #tpu.memory_space<vmem>>, %arg7: memref<1x128xf32, #tpu.memory_space<vmem>>, %arg8: memref<1x128xf32, #tpu.memory_space<vmem>>, %arg9: memref<8x16x128xf32, #tpu.memory_space<vmem>>, %arg10: memref<8x18x128xf32, #tpu.memory_space<vmem>>) attributes {dimension_semantics = [#tpu.dimension_semantics<arbitrary>], iteration_bounds = array<i64: 1>, scalar_prefetch = 0 : i64, scratch_operands = 1 : i64, tpu.core_type = #tpu.core_type<tc>, window_params = [{pipeline_mode = #tpu.pipeline_mode<synchronous>, transform_indices = @transform_0, window_bounds = array<i64: 8, 16, 128>}, {pipeline_mode = #tpu.pipeline_mode<synchronous>, transform_indices = @transform_1, window_bounds = array<i64: 3, 128, 128>}, {pipeline_mode = #tpu.pipeline_mode<synchronous>, transform_indices = @transform_2, window_bounds = array<i64: 3, 128, 128>}, {pipeline_mode = #tpu.pipeline_mode<synchronous>, transform_indices = @transform_3, window_bounds = array<i64: 128, 128>}, {pipeline_mode = #tpu.pipeline_mode<synchronous>, transform_indices = @transform_4, window_bounds = array<i64: 1, 128>}, {pipeline_mode = #tpu.pipeline_mode<synchronous>, transform_indices = @transform_5, window_bounds = array<i64: 1, 128>}, {pipeline_mode = #tpu.pipeline_mode<synchronous>, transform_indices = @transform_6, window_bounds = array<i64: 1, 128>}, {pipeline_mode = #tpu.pipeline_mode<synchronous>, transform_indices = @transform_7, window_bounds = array<i64: 1, 128>}, {pipeline_mode = #tpu.pipeline_mode<synchronous>, transform_indices = @transform_8, window_bounds = array<i64: 8, 16, 128>}]} {
    %cst = arith.constant 0.000000e+00 : f32
    %0 = vector.broadcast %cst : f32 to vector<8x18x128xf32>
    %c0 = arith.constant 0 : index
    %c0_0 = arith.constant 0 : index
    %c0_1 = arith.constant 0 : index
    %1 = vector.load %arg10[%c0, %c0_0, %c0_1] : memref<8x18x128xf32, #tpu.memory_space<vmem>>, vector<8x18x128xf32>
    tpu.vector_store %arg10[%c0, %c0_0, %c0_1], %0 {strides = array<i32>} : memref<8x18x128xf32, #tpu.memory_space<vmem>>, vector<8x18x128xf32>,
    %c0_2 = arith.constant 0 : index
    %c0_3 = arith.constant 0 : index
    %c0_4 = arith.constant 0 : index
    %2 = vector.load %arg1[%c0_2, %c0_3, %c0_4] : memref<8x16x128xf32, #tpu.memory_space<vmem>>, vector<8x16x128xf32>
    %c0_5 = arith.constant 0 : index
    %c1 = arith.constant 1 : index
    %c0_6 = arith.constant 0 : index
    %3 = vector.load %arg10[%c0_5, %c1, %c0_6] : memref<8x18x128xf32, #tpu.memory_space<vmem>>, vector<8x16x128xf32>
    tpu.vector_store %arg10[%c0_5, %c1, %c0_6], %2 {strides = array<i32>} : memref<8x18x128xf32, #tpu.memory_space<vmem>>, vector<8x16x128xf32>,
    %cst_7 = arith.constant 0.000000e+00 : f32
    %4 = vector.broadcast %cst_7 : f32 to vector<128x128xf32>
    %c0_8 = arith.constant 0 : index
    %c0_9 = arith.constant 0 : index
    %c0_10 = arith.constant 0 : index
    %5 = vector.load %arg10[%c0_8, %c0_9, %c0_10] : memref<8x18x128xf32, #tpu.memory_space<vmem>>, vector<8x16x128xf32>
    %6 = vector.shape_cast %5 : vector<8x16x128xf32> to vector<128x128xf32>
    %c0_11 = arith.constant 0 : index
    %c0_12 = arith.constant 0 : index
    %c0_13 = arith.constant 0 : index
    %7 = vector.load %arg2[%c0_11, %c0_12, %c0_13] : memref<3x128x128xf32, #tpu.memory_space<vmem>>, vector<1x128x128xf32>
    %8 = vector.shape_cast %7 : vector<1x128x128xf32> to vector<128x128xf32>
    %cst_14 = arith.constant dense<0.000000e+00> : vector<128x128xf32>
    %9 = tpu.matmul %6, %8, %cst_14 {dimension_numbers = #tpu.dot_dimension_numbers<[1], [0], [0], [1], [0, 0, 1, 1], [], []>} : vector<128x128xf32>, vector<128x128xf32>, vector<128x128xf32> -> vector<128x128xf32>
    %10 = arith.addf %4, %9 : vector<128x128xf32>
    %c0_15 = arith.constant 0 : index
    %c1_16 = arith.constant 1 : index
    %c0_17 = arith.constant 0 : index
    %11 = vector.load %arg10[%c0_15, %c1_16, %c0_17] : memref<8x18x128xf32, #tpu.memory_space<vmem>>, vector<8x16x128xf32>
    %12 = vector.shape_cast %11 : vector<8x16x128xf32> to vector<128x128xf32>
    %c1_18 = arith.constant 1 : index
    %c0_19 = arith.constant 0 : index
    %c0_20 = arith.constant 0 : index
    %13 = vector.load %arg2[%c1_18, %c0_19, %c0_20] : memref<3x128x128xf32, #tpu.memory_space<vmem>>, vector<1x128x128xf32>
    %14 = vector.shape_cast %13 : vector<1x128x128xf32> to vector<128x128xf32>
    %cst_21 = arith.constant dense<0.000000e+00> : vector<128x128xf32>
    %15 = tpu.matmul %12, %14, %cst_21 {dimension_numbers = #tpu.dot_dimension_numbers<[1], [0], [0], [1], [0, 0, 1, 1], [], []>} : vector<128x128xf32>, vector<128x128xf32>, vector<128x128xf32> -> vector<128x128xf32>
    %16 = arith.addf %10, %15 : vector<128x128xf32>
    %c0_22 = arith.constant 0 : index
    %c2 = arith.constant 2 : index
    %c0_23 = arith.constant 0 : index
    %17 = vector.load %arg10[%c0_22, %c2, %c0_23] : memref<8x18x128xf32, #tpu.memory_space<vmem>>, vector<8x16x128xf32>
    %18 = vector.shape_cast %17 : vector<8x16x128xf32> to vector<128x128xf32>
    %c2_24 = arith.constant 2 : index
    %c0_25 = arith.constant 0 : index
    %c0_26 = arith.constant 0 : index
    %19 = vector.load %arg2[%c2_24, %c0_25, %c0_26] : memref<3x128x128xf32, #tpu.memory_space<vmem>>, vector<1x128x128xf32>
    %20 = vector.shape_cast %19 : vector<1x128x128xf32> to vector<128x128xf32>
    %cst_27 = arith.constant dense<0.000000e+00> : vector<128x128xf32>
    %21 = tpu.matmul %18, %20, %cst_27 {dimension_numbers = #tpu.dot_dimension_numbers<[1], [0], [0], [1], [0, 0, 1, 1], [], []>} : vector<128x128xf32>, vector<128x128xf32>, vector<128x128xf32> -> vector<128x128xf32>
    %22 = arith.addf %16, %21 : vector<128x128xf32>
    %c0_28 = arith.constant 0 : index
    %c0_29 = arith.constant 0 : index
    %23 = vector.load %arg5[%c0_28, %c0_29] : memref<1x128xf32, #tpu.memory_space<vmem>>, vector<1x128xf32>
    %c0_30 = arith.constant 0 : index
    %c0_31 = arith.constant 0 : index
    %24 = vector.load %arg6[%c0_30, %c0_31] : memref<1x128xf32, #tpu.memory_space<vmem>>, vector<1x128xf32>
    %cst_32 = arith.constant dense<0.000000e+00> : vector<128xf32>
    %25 = vector.multi_reduction <add>, %22, %cst_32 [0] : vector<128x128xf32> to vector<128xf32>
    %26 = vector.shape_cast %25 : vector<128xf32> to vector<1x128xf32>
    %27 = arith.mulf %22, %22 : vector<128x128xf32>
    %cst_33 = arith.constant dense<0.000000e+00> : vector<128xf32>
    %28 = vector.multi_reduction <add>, %27, %cst_33 [0] : vector<128x128xf32> to vector<128xf32>
    %29 = vector.shape_cast %28 : vector<128xf32> to vector<1x128xf32>
    %30 = tpu.concatenate %26, %29 in 0 : vector<1x128xf32>, vector<1x128xf32> -> vector<2x128xf32>
    %c0_34 = arith.constant 0 : index
    %c0_35 = arith.constant 0 : index
    %31 = vector.load %arg4[%c0_34, %c0_35] : memref<128x128xf32, #tpu.memory_space<vmem>>, vector<128x128xf32>
    %cst_36 = arith.constant dense<0.000000e+00> : vector<2x128xf32>
    %32 = tpu.matmul %30, %31, %cst_36 {dimension_numbers = #tpu.dot_dimension_numbers<[1], [0], [0], [1], [0, 0, 1, 1], [], []>} : vector<2x128xf32>, vector<128x128xf32>, vector<2x128xf32> -> vector<2x128xf32>
    %33 = vector.extract_strided_slice %32 {offsets = [0, 0], sizes = [1, 128], strides = [1, 1]} : vector<2x128xf32> to vector<1x128xf32>
    %34 = vector.extract_strided_slice %32 {offsets = [1, 0], sizes = [1, 128], strides = [1, 1]} : vector<2x128xf32> to vector<1x128xf32>
    %35 = arith.mulf %33, %33 : vector<1x128xf32>
    %36 = arith.subf %34, %35 : vector<1x128xf32>
    %37 = vector.broadcast %33 : vector<1x128xf32> to vector<128x128xf32>
    %38 = arith.subf %22, %37 : vector<128x128xf32>
    %cst_37 = arith.constant 9.99999974E-6 : f32
    %39 = vector.broadcast %cst_37 : f32 to vector<1x128xf32>
    %40 = arith.addf %36, %39 : vector<1x128xf32>
    %41 = math.rsqrt %40 : vector<1x128xf32>
    %42 = arith.mulf %23, %41 : vector<1x128xf32>
    %43 = vector.broadcast %42 : vector<1x128xf32> to vector<128x128xf32>
    %44 = arith.mulf %38, %43 : vector<128x128xf32>
    %45 = vector.broadcast %24 : vector<1x128xf32> to vector<128x128xf32>
    %46 = arith.addf %44, %45 : vector<128x128xf32>
    %cst_38 = arith.constant 0.000000e+00 : f32
    %47 = vector.broadcast %cst_38 : f32 to vector<128x128xf32>
    %48 = arith.maximumf %46, %47 : vector<128x128xf32>
    %49 = vector.shape_cast %48 : vector<128x128xf32> to vector<8x16x128xf32>
    %c0_39 = arith.constant 0 : index
    %c1_40 = arith.constant 1 : index
    %c0_41 = arith.constant 0 : index
    %50 = vector.load %arg10[%c0_39, %c1_40, %c0_41] : memref<8x18x128xf32, #tpu.memory_space<vmem>>, vector<8x16x128xf32>
    tpu.vector_store %arg10[%c0_39, %c1_40, %c0_41], %49 {strides = array<i32>} : memref<8x18x128xf32, #tpu.memory_space<vmem>>, vector<8x16x128xf32>,
    %cst_42 = arith.constant 0.000000e+00 : f32
    %51 = vector.broadcast %cst_42 : f32 to vector<128x128xf32>
    %c0_43 = arith.constant 0 : index
    %c0_44 = arith.constant 0 : index
    %c0_45 = arith.constant 0 : index
    %52 = vector.load %arg10[%c0_43, %c0_44, %c0_45] : memref<8x18x128xf32, #tpu.memory_space<vmem>>, vector<8x16x128xf32>
    %53 = vector.shape_cast %52 : vector<8x16x128xf32> to vector<128x128xf32>
    %c0_46 = arith.constant 0 : index
    %c0_47 = arith.constant 0 : index
    %c0_48 = arith.constant 0 : index
    %54 = vector.load %arg3[%c0_46, %c0_47, %c0_48] : memref<3x128x128xf32, #tpu.memory_space<vmem>>, vector<1x128x128xf32>
    %55 = vector.shape_cast %54 : vector<1x128x128xf32> to vector<128x128xf32>
    %cst_49 = arith.constant dense<0.000000e+00> : vector<128x128xf32>
    %56 = tpu.matmul %53, %55, %cst_49 {dimension_numbers = #tpu.dot_dimension_numbers<[1], [0], [0], [1], [0, 0, 1, 1], [], []>} : vector<128x128xf32>, vector<128x128xf32>, vector<128x128xf32> -> vector<128x128xf32>
    %57 = arith.addf %51, %56 : vector<128x128xf32>
    %c0_50 = arith.constant 0 : index
    %c1_51 = arith.constant 1 : index
    %c0_52 = arith.constant 0 : index
    %58 = vector.load %arg10[%c0_50, %c1_51, %c0_52] : memref<8x18x128xf32, #tpu.memory_space<vmem>>, vector<8x16x128xf32>
    %59 = vector.shape_cast %58 : vector<8x16x128xf32> to vector<128x128xf32>
    %c1_53 = arith.constant 1 : index
    %c0_54 = arith.constant 0 : index
    %c0_55 = arith.constant 0 : index
    %60 = vector.load %arg3[%c1_53, %c0_54, %c0_55] : memref<3x128x128xf32, #tpu.memory_space<vmem>>, vector<1x128x128xf32>
    %61 = vector.shape_cast %60 : vector<1x128x128xf32> to vector<128x128xf32>
    %cst_56 = arith.constant dense<0.000000e+00> : vector<128x128xf32>
    %62 = tpu.matmul %59, %61, %cst_56 {dimension_numbers = #tpu.dot_dimension_numbers<[1], [0], [0], [1], [0, 0, 1, 1], [], []>} : vector<128x128xf32>, vector<128x128xf32>, vector<128x128xf32> -> vector<128x128xf32>
    %63 = arith.addf %57, %62 : vector<128x128xf32>
    %c0_57 = arith.constant 0 : index
    %c2_58 = arith.constant 2 : index
    %c0_59 = arith.constant 0 : index
    %64 = vector.load %arg10[%c0_57, %c2_58, %c0_59] : memref<8x18x128xf32, #tpu.memory_space<vmem>>, vector<8x16x128xf32>
    %65 = vector.shape_cast %64 : vector<8x16x128xf32> to vector<128x128xf32>
    %c2_60 = arith.constant 2 : index
    %c0_61 = arith.constant 0 : index
    %c0_62 = arith.constant 0 : index
    %66 = vector.load %arg3[%c2_60, %c0_61, %c0_62] : memref<3x128x128xf32, #tpu.memory_space<vmem>>, vector<1x128x128xf32>
    %67 = vector.shape_cast %66 : vector<1x128x128xf32> to vector<128x128xf32>
    %cst_63 = arith.constant dense<0.000000e+00> : vector<128x128xf32>
    %68 = tpu.matmul %65, %67, %cst_63 {dimension_numbers = #tpu.dot_dimension_numbers<[1], [0], [0], [1], [0, 0, 1, 1], [], []>} : vector<128x128xf32>, vector<128x128xf32>, vector<128x128xf32> -> vector<128x128xf32>
    %69 = arith.addf %63, %68 : vector<128x128xf32>
    %c0_64 = arith.constant 0 : index
    %c0_65 = arith.constant 0 : index
    %70 = vector.load %arg7[%c0_64, %c0_65] : memref<1x128xf32, #tpu.memory_space<vmem>>, vector<1x128xf32>
    %c0_66 = arith.constant 0 : index
    %c0_67 = arith.constant 0 : index
    %71 = vector.load %arg8[%c0_66, %c0_67] : memref<1x128xf32, #tpu.memory_space<vmem>>, vector<1x128xf32>
    %cst_68 = arith.constant dense<0.000000e+00> : vector<128xf32>
    %72 = vector.multi_reduction <add>, %69, %cst_68 [0] : vector<128x128xf32> to vector<128xf32>
    %73 = vector.shape_cast %72 : vector<128xf32> to vector<1x128xf32>
    %74 = arith.mulf %69, %69 : vector<128x128xf32>
    %cst_69 = arith.constant dense<0.000000e+00> : vector<128xf32>
    %75 = vector.multi_reduction <add>, %74, %cst_69 [0] : vector<128x128xf32> to vector<128xf32>
    %76 = vector.shape_cast %75 : vector<128xf32> to vector<1x128xf32>
    %77 = tpu.concatenate %73, %76 in 0 : vector<1x128xf32>, vector<1x128xf32> -> vector<2x128xf32>
    %c0_70 = arith.constant 0 : index
    %c0_71 = arith.constant 0 : index
    %78 = vector.load %arg4[%c0_70, %c0_71] : memref<128x128xf32, #tpu.memory_space<vmem>>, vector<128x128xf32>
    %cst_72 = arith.constant dense<0.000000e+00> : vector<2x128xf32>
    %79 = tpu.matmul %77, %78, %cst_72 {dimension_numbers = #tpu.dot_dimension_numbers<[1], [0], [0], [1], [0, 0, 1, 1], [], []>} : vector<2x128xf32>, vector<128x128xf32>, vector<2x128xf32> -> vector<2x128xf32>
    %80 = vector.extract_strided_slice %79 {offsets = [0, 0], sizes = [1, 128], strides = [1, 1]} : vector<2x128xf32> to vector<1x128xf32>
    %81 = vector.extract_strided_slice %79 {offsets = [1, 0], sizes = [1, 128], strides = [1, 1]} : vector<2x128xf32> to vector<1x128xf32>
    %82 = arith.mulf %80, %80 : vector<1x128xf32>
    %83 = arith.subf %81, %82 : vector<1x128xf32>
    %84 = vector.broadcast %80 : vector<1x128xf32> to vector<128x128xf32>
    %85 = arith.subf %69, %84 : vector<128x128xf32>
    %cst_73 = arith.constant 9.99999974E-6 : f32
    %86 = vector.broadcast %cst_73 : f32 to vector<1x128xf32>
    %87 = arith.addf %83, %86 : vector<1x128xf32>
    %88 = math.rsqrt %87 : vector<1x128xf32>
    %89 = arith.mulf %70, %88 : vector<1x128xf32>
    %90 = vector.broadcast %89 : vector<1x128xf32> to vector<128x128xf32>
    %91 = arith.mulf %85, %90 : vector<128x128xf32>
    %92 = vector.broadcast %71 : vector<1x128xf32> to vector<128x128xf32>
    %93 = arith.addf %91, %92 : vector<128x128xf32>
    %c0_74 = arith.constant 0 : index
    %c0_75 = arith.constant 0 : index
    %c0_76 = arith.constant 0 : index
    %94 = vector.load %arg1[%c0_74, %c0_75, %c0_76] : memref<8x16x128xf32, #tpu.memory_space<vmem>>, vector<8x16x128xf32>
    %95 = vector.shape_cast %94 : vector<8x16x128xf32> to vector<128x128xf32>
    %96 = arith.addf %93, %95 : vector<128x128xf32>
    %cst_77 = arith.constant 0.000000e+00 : f32
    %97 = vector.broadcast %cst_77 : f32 to vector<128x128xf32>
    %98 = arith.maximumf %96, %97 : vector<128x128xf32>
    %99 = vector.shape_cast %98 : vector<128x128xf32> to vector<8x16x128xf32>
    %c0_78 = arith.constant 0 : index
    %c0_79 = arith.constant 0 : index
    %c0_80 = arith.constant 0 : index
    %100 = vector.load %arg9[%c0_78, %c0_79, %c0_80] : memref<8x16x128xf32, #tpu.memory_space<vmem>>, vector<8x16x128xf32>
    tpu.vector_store %arg9[%c0_78, %c0_79, %c0_80], %99 {strides = array<i32>} : memref<8x16x128xf32, #tpu.memory_space<vmem>>, vector<8x16x128xf32>,
    return
  }
  func.func @transform_0(%arg0: i32) -> (i32, i32, i32) {
    %c0_i32 = arith.constant 0 : i32
    %c0_i32_0 = arith.constant 0 : i32
    %c0_i32_1 = arith.constant 0 : i32
    %c0_i32_2 = arith.constant 0 : i32
    return %c0_i32, %c0_i32_0, %c0_i32_1 : i32, i32, i32
  }
  func.func @transform_1(%arg0: i32) -> (i32, i32, i32) {
    %c0_i32 = arith.constant 0 : i32
    %c0_i32_0 = arith.constant 0 : i32
    %c0_i32_1 = arith.constant 0 : i32
    %c0_i32_2 = arith.constant 0 : i32
    return %c0_i32, %c0_i32_0, %c0_i32_1 : i32, i32, i32
  }
  func.func @transform_2(%arg0: i32) -> (i32, i32, i32) {
    %c0_i32 = arith.constant 0 : i32
    %c0_i32_0 = arith.constant 0 : i32
    %c0_i32_1 = arith.constant 0 : i32
    %c0_i32_2 = arith.constant 0 : i32
    return %c0_i32, %c0_i32_0, %c0_i32_1 : i32, i32, i32
  }
  func.func @transform_3(%arg0: i32) -> (i32, i32) {
    %c0_i32 = arith.constant 0 : i32
    %c0_i32_0 = arith.constant 0 : i32
    %c0_i32_1 = arith.constant 0 : i32
    return %c0_i32, %c0_i32_0 : i32, i32
  }
  func.func @transform_4(%arg0: i32) -> (i32, i32) {
    %c0_i32 = arith.constant 0 : i32
    %c0_i32_0 = arith.constant 0 : i32
    %c0_i32_1 = arith.constant 0 : i32
    return %c0_i32, %c0_i32_0 : i32, i32
  }
  func.func @transform_5(%arg0: i32) -> (i32, i32) {
    %c0_i32 = arith.constant 0 : i32
    %c0_i32_0 = arith.constant 0 : i32
    %c0_i32_1 = arith.constant 0 : i32
    return %c0_i32, %c0_i32_0 : i32, i32
  }
  func.func @transform_6(%arg0: i32) -> (i32, i32) {
    %c0_i32 = arith.constant 0 : i32
    %c0_i32_0 = arith.constant 0 : i32
    %c0_i32_1 = arith.constant 0 : i32
    return %c0_i32, %c0_i32_0 : i32, i32
  }
  func.func @transform_7(%arg0: i32) -> (i32, i32) {
    %c0_i32 = arith.constant 0 : i32
    %c0_i32_0 = arith.constant 0 : i32
    %c0_i32_1 = arith.constant 0 : i32
    return %c0_i32, %c0_i32_0 : i32, i32
  }
  func.func @transform_8(%arg0: i32) -> (i32, i32, i32) {
    %c0_i32 = arith.constant 0 : i32
    %c0_i32_0 = arith.constant 0 : i32
    %c0_i32_1 = arith.constant 0 : i32
    %c0_i32_2 = arith.constant 0 : i32
    return %c0_i32, %c0_i32_0, %c0_i32_1 : i32, i32, i32
  }
}

</mosaic_0001>

<llo_original>
// kernel: tile.23
$region0: #{tile.23}
  #allocation0 [shape = 's32[1]{0}', space=sflag, size = 0x4, scoped, tag = 'scoped memory for tile.23']
  %s0 = inlined_call_operand.vmem [shape: f32[8], index: 0, kind: input, shape index: {}]
  %s1 = inlined_call_operand.vmem [shape: f32[16,8], index: 1, kind: output, shape index: {}]
  // Predicated region
  $region2: #{tile.23} parent=0 // pred_check
    _
  $region3: #{tile.23} parent=0 // pred_check_branch
    %3 = sbr.rel (0) target = $region5
  $region4: #{tile.23} parent=0 // pred_region
    _
  $region5: #{tile.23} parent=0 // pred_fallthru
    _
  %v4 = vld [vmem:[%s0] ss:$0 sm:$0xff]
  %5 = vst [vmem:[%s1] sm:$0xff] %v4
  %s6 = scalar_lea.vmem %s1, 8
  %7 = vst [vmem:[%s6] sm:$0xff] %v4

// kernel: tile.24
$region0: #{tile.24}
  %s0 = inlined_call_operand.vmem [shape: f32[16,8], index: 0, kind: input, shape index: {}]
  %s1 = inlined_call_operand.vmem [shape: f32[1,128], index: 1, kind: output, shape index: {}]
  $region1: #{tile.24} parent=0
    #allocation0 [shape = 'u8[4096]{0}', space=vmem, size = 0x1000, scoped, tag = 'scoped mem for output reshape']
    %v2 = vld [vmem:[%s0] sm:$0x1]
    %vm3 = vcmask 64512
    %4 = vst.msk [vmem:[#allocation0] sm:$0x1] %vm3, %v2
    %s5 = scalar_lea.vmem %s0, 15
    %v6 = vld [vmem:[%s5] sm:$0x1]
    %7 = vrot.lane.b32.xlu0 %v6, 120
    %v8 = vpop.permute.xlu0 %7
    %vm9 = vcmask 1048512
    %10 = vst.msk [vmem:[#allocation0] sm:$0x1] %vm9, %v8
    %s11 = scalar_lea.vmem %s0, 14
    %v12 = vld [vmem:[%s11] sm:$0x1]
    %13 = vrot.lane.b32.xlu0 %v12, 112
    %v14 = vpop.permute.xlu0 %13
    %vm15 = vcmask 982912
    %16 = vst.msk [vmem:[#allocation0] sm:$0x1] %vm15, %v14
    %s17 = scalar_lea.vmem %s0, 13
    %v18 = vld [vmem:[%s17] sm:$0x1]
    %19 = vrot.lane.b32.xlu0 %v18, 104
    %v20 = vpop.permute.xlu0 %19
    %vm21 = vcmask 917312
    %22 = vst.msk [vmem:[#allocation0] sm:$0x1] %vm21, %v20
    %s23 = scalar_lea.vmem %s0, 12
    %v24 = vld [vmem:[%s23] sm:$0x1]
    %25 = vrot.lane.b32.xlu0 %v24, 96
    %v26 = vpop.permute.xlu0 %25
    %vm27 = vcmask 851712
    %28 = vst.msk [vmem:[#allocation0] sm:$0x1] %vm27, %v26
    %s29 = scalar_lea.vmem %s0, 11
    %v30 = vld [vmem:[%s29] sm:$0x1]
    %31 = vrot.lane.b32.xlu0 %v30, 88
    %v32 = vpop.permute.xlu0 %31
    %vm33 = vcmask 786112
    %34 = vst.msk [vmem:[#allocation0] sm:$0x1] %vm33, %v32
    %s35 = scalar_lea.vmem %s0, 10
    %v36 = vld [vmem:[%s35] sm:$0x1]
    %37 = vrot.lane.b32.xlu0 %v36, 80
    %v38 = vpop.permute.xlu0 %37
    %vm39 = vcmask 720512
    %40 = vst.msk [vmem:[#allocation0] sm:$0x1] %vm39, %v38
    %s41 = scalar_lea.vmem %s0, 9
    %v42 = vld [vmem:[%s41] sm:$0x1]
    %43 = vrot.lane.b32.xlu0 %v42, 72
    %v44 = vpop.permute.xlu0 %43
    %vm45 = vcmask 654912
    %46 = vst.msk [vmem:[#allocation0] sm:$0x1] %vm45, %v44
    %s47 = scalar_lea.vmem %s0, 8
    %v48 = vld [vmem:[%s47] sm:$0x1]
    %49 = vrot.lane.b32.xlu0 %v48, 64
    %v50 = vpop.permute.xlu0 %49
    %vm51 = vcmask 589312
    %52 = vst.msk [vmem:[#allocation0] sm:$0x1] %vm51, %v50
    %s53 = scalar_lea.vmem %s0, 7
    %v54 = vld [vmem:[%s53] sm:$0x1]
    %55 = vrot.lane.b32.xlu0 %v54, 56
    %v56 = vpop.permute.xlu0 %55
    %vm57 = vcmask 523712
    %58 = vst.msk [vmem:[#allocation0] sm:$0x1] %vm57, %v56
    %s59 = scalar_lea.vmem %s0, 6
    %v60 = vld [vmem:[%s59] sm:$0x1]
    %61 = vrot.lane.b32.xlu0 %v60, 48
    %v62 = vpop.permute.xlu0 %61
    %vm63 = vcmask 458112
    %64 = vst.msk [vmem:[#allocation0] sm:$0x1] %vm63, %v62
    %s65 = scalar_lea.vmem %s0, 5
    %v66 = vld [vmem:[%s65] sm:$0x1]
    %67 = vrot.lane.b32.xlu0 %v66, 40
    %v68 = vpop.permute.xlu0 %67
    %vm69 = vcmask 392512
    %70 = vst.msk [vmem:[#allocation0] sm:$0x1] %vm69, %v68
    %s71 = scalar_lea.vmem %s0, 4
    %v72 = vld [vmem:[%s71] sm:$0x1]
    %73 = vrot.lane.b32.xlu0 %v72, 32
    %v74 = vpop.permute.xlu0 %73
    %vm75 = vcmask 326912
    %76 = vst.msk [vmem:[#allocation0] sm:$0x1] %vm75, %v74
    %s77 = scalar_lea.vmem %s0, 3
    %v78 = vld [vmem:[%s77] sm:$0x1]
    %79 = vrot.lane.b32.xlu0 %v78, 24
    %v80 = vpop.permute.xlu0 %79
    %vm81 = vcmask 261312
    %82 = vst.msk [vmem:[#allocation0] sm:$0x1] %vm81, %v80
    %s83 = scalar_lea.vmem %s0, 2
    %v84 = vld [vmem:[%s83] sm:$0x1]
    %85 = vrot.lane.b32.xlu0 %v84, 16
    %v86 = vpop.permute.xlu0 %85
    %vm87 = vcmask 195712
    %88 = vst.msk [vmem:[#allocation0] sm:$0x1] %vm87, %v86
    %s89 = scalar_lea.vmem %s0, 1
    %v90 = vld [vmem:[%s89] sm:$0x1]
    %91 = vrot.lane.b32.xlu0 %v90, 8
    %v92 = vpop.permute.xlu0 %91
    %vm93 = vcmask 130112
    %94 = vst.msk [vmem:[#allocation0] sm:$0x1] %vm93, %v92
    %s96 = sshll.u32 1, 1
    %s97 = ssub.s32 %s96, 1
    %v99 = vld [vmem:[#allocation0] sm:%s97]
    %s100 = sshll.u32 1, 1
    %s101 = ssub.s32 %s100, 1
    %102 = vst [vmem:[%s1] sm:%s101] %v99

// kernel: basic_block_nchw.1
$region0: #{basic_block_nchw.1}
  #allocation0 [shape = 'u32[]', space=smem, size = 0x4, offset = 0x4, fixed_abs, tag = 'smem constant byte address 0x4 - core index']
  #allocation1 [shape = 'u32[144,128]{1,0:T(1,128)}', space=vmem, size = 0x12000, scoped, tag = 'internal scratch']
  #allocation2 [shape = 'f32[8,18,128]{2,1,0:T(8,128)}', space=vmem, size = 0x18000, scoped, tag = 'scratch operand']
  %s0 = inlined_call_operand.vmem [shape: f32[8,16,128], index: 0, kind: input, shape index: {}]
  %s1 = inlined_call_operand.vmem [shape: f32[3,128,128], index: 1, kind: input, shape index: {}]
  %s2 = inlined_call_operand.vmem [shape: f32[3,128,128], index: 2, kind: input, shape index: {}]
  %s3 = inlined_call_operand.vmem [shape: f32[128,128], index: 3, kind: input, shape index: {}]
  %s4 = inlined_call_operand.vmem [shape: f32[1,128], index: 4, kind: input, shape index: {}]
  %s5 = inlined_call_operand.vmem [shape: f32[1,128], index: 5, kind: input, shape index: {}]
  %s6 = inlined_call_operand.vmem [shape: f32[1,128], index: 6, kind: input, shape index: {}]
  %s7 = inlined_call_operand.vmem [shape: f32[1,128], index: 7, kind: input, shape index: {}]
  %s8 = inlined_call_operand.vmem [shape: f32[8,16,128], index: 8, kind: output, shape index: {}]
  %s9 = sld [smem:[#allocation0]]
  $region42: #{basic_block_nchw.1} parent=0
    _
  %s11 = ssub.s32 1, %s9
  %s12 = scalar_select 0, %s11, %s9
  // Predicated region
  $region2: #{basic_block_nchw.1} parent=0 // pred_check
    _
  $region3: #{basic_block_nchw.1} parent=0 // pred_check_branch
    %14 = sbr.rel (0) target = $region5
  $region4: #{basic_block_nchw.1} parent=0 // pred_region
    _
  $region5: #{basic_block_nchw.1} parent=0 // pred_fallthru
    _
  // Predicated region
  $region6: #{basic_block_nchw.1} parent=0 // pred_check
    _
  $region7: #{basic_block_nchw.1} parent=0 // pred_check_branch
    %16 = sbr.rel (0) target = $region9
  $region8: #{basic_block_nchw.1} parent=0 // pred_region
    _
  $region9: #{basic_block_nchw.1} parent=0 // pred_fallthru
    _
  // Predicated region
  $region10: #{basic_block_nchw.1} parent=0 // pred_check
    _
  $region11: #{basic_block_nchw.1} parent=0 // pred_check_branch
    %18 = sbr.rel (0) target = $region13
  $region12: #{basic_block_nchw.1} parent=0 // pred_region
    _
  $region13: #{basic_block_nchw.1} parent=0 // pred_fallthru
    _
  // Predicated region
  $region14: #{basic_block_nchw.1} parent=0 // pred_check
    _
  $region15: #{basic_block_nchw.1} parent=0 // pred_check_branch
    %20 = sbr.rel (0) target = $region17
  $region16: #{basic_block_nchw.1} parent=0 // pred_region
    _
  $region17: #{basic_block_nchw.1} parent=0 // pred_fallthru
    _
  // Predicated region
  $region18: #{basic_block_nchw.1} parent=0 // pred_check
    _
  $region19: #{basic_block_nchw.1} parent=0 // pred_check_branch
    %22 = sbr.rel (0) target = $region21
  $region20: #{basic_block_nchw.1} parent=0 // pred_region
    _
  $region21: #{basic_block_nchw.1} parent=0 // pred_fallthru
    _
  // Predicated region
  $region22: #{basic_block_nchw.1} parent=0 // pred_check
    _
  $region23: #{basic_block_nchw.1} parent=0 // pred_check_branch
    %24 = sbr.rel (0) target = $region25
  $region24: #{basic_block_nchw.1} parent=0 // pred_region
    _
  $region25: #{basic_block_nchw.1} parent=0 // pred_fallthru
    _
  // Predicated region
  $region26: #{basic_block_nchw.1} parent=0 // pred_check
    _
  $region27: #{basic_block_nchw.1} parent=0 // pred_check_branch
    %26 = sbr.rel (0) target = $region29
  $region28: #{basic_block_nchw.1} parent=0 // pred_region
    _
  $region29: #{basic_block_nchw.1} parent=0 // pred_fallthru
    _
  // Predicated region
  $region30: #{basic_block_nchw.1} parent=0 // pred_check
    _
  $region31: #{basic_block_nchw.1} parent=0 // pred_check_branch
    %28 = sbr.rel (0) target = $region33
  $region32: #{basic_block_nchw.1} parent=0 // pred_region
    _
  $region33: #{basic_block_nchw.1} parent=0 // pred_fallthru
    _
  %29 = vst [vmem:[#allocation2] sm:$0xff] 0.0
  %30 = vst [vmem:[#allocation2 + $0x8] sm:$0xff] 0.0
  %31 = vst [vmem:[#allocation2 + $0x10] sm:$0x3] 0.0
  %32 = vst [vmem:[#allocation2 + $0x18] sm:$0xff] 0.0
  %33 = vst [vmem:[#allocation2 + $0x20] sm:$0xff] 0.0
  %34 = vst [vmem:[#allocation2 + $0x28] sm:$0x3] 0.0
  %35 = vst [vmem:[#allocation2 + $0x30] sm:$0xff] 0.0
  %36 = vst [vmem:[#allocation2 + $0x38] sm:$0xff] 0.0
  %37 = vst [vmem:[#allocation2 + $0x40] sm:$0x3] 0.0
  %38 = vst [vmem:[#allocation2 + $0x48] sm:$0xff] 0.0
  %39 = vst [vmem:[#allocation2 + $0x50] sm:$0xff] 0.0
  %40 = vst [vmem:[#allocation2 + $0x58] sm:$0x3] 0.0
  %41 = vst [vmem:[#allocation2 + $0x60] sm:$0xff] 0.0
  %42 = vst [vmem:[#allocation2 + $0x68] sm:$0xff] 0.0
  %43 = vst [vmem:[#allocation2 + $0x70] sm:$0x3] 0.0
  %44 = vst [vmem:[#allocation2 + $0x78] sm:$0xff] 0.0
  %45 = vst [vmem:[#allocation2 + $0x80] sm:$0xff] 0.0
  %46 = vst [vmem:[#allocation2 + $0x88] sm:$0x3] 0.0
  %47 = vst [vmem:[#allocation2 + $0x90] sm:$0xff] 0.0
  %48 = vst [vmem:[#allocation2 + $0x98] sm:$0xff] 0.0
  %49 = vst [vmem:[#allocation2 + $0xa0] sm:$0x3] 0.0
  %50 = vst [vmem:[#allocation2 + $0xa8] sm:$0xff] 0.0
  %51 = vst [vmem:[#allocation2 + $0xb0] sm:$0xff] 0.0
  %52 = vst [vmem:[#allocation2 + $0xb8] sm:$0x3] 0.0
  %v53 = vld [vmem:[%s0] sm:$0xff]
  %v54 = vld [vmem:[%s0 + $0x8] sm:$0xff]
  %v55 = vld [vmem:[%s0 + $0x10] sm:$0xff]
  %v56 = vld [vmem:[%s0 + $0x18] sm:$0xff]
  %v57 = vld [vmem:[%s0 + $0x20] sm:$0xff]
  %v58 = vld [vmem:[%s0 + $0x28] sm:$0xff]
  %v59 = vld [vmem:[%s0 + $0x30] sm:$0xff]
  %v60 = vld [vmem:[%s0 + $0x38] sm:$0xff]
  %v61 = vld [vmem:[%s0 + $0x40] sm:$0xff]
  %v62 = vld [vmem:[%s0 + $0x48] sm:$0xff]
  %v63 = vld [vmem:[%s0 + $0x50] sm:$0xff]
  %v64 = vld [vmem:[%s0 + $0x58] sm:$0xff]
  %v65 = vld [vmem:[%s0 + $0x60] sm:$0xff]
  %v66 = vld [vmem:[%s0 + $0x68] sm:$0xff]
  %v67 = vld [vmem:[%s0 + $0x70] sm:$0xff]
  %v68 = vld [vmem:[%s0 + $0x78] sm:$0xff]
  %69 = vst [vmem:[#allocation2 + $0x1] sm:$0xff] %v53
  %70 = vst [vmem:[#allocation2 + $0x9] sm:$0xff] %v54
  %71 = vst [vmem:[#allocation2 + $0x19] sm:$0xff] %v55
  %72 = vst [vmem:[#allocation2 + $0x21] sm:$0xff] %v56
  %73 = vst [vmem:[#allocation2 + $0x31] sm:$0xff] %v57
  %74 = vst [vmem:[#allocation2 + $0x39] sm:$0xff] %v58
  %75 = vst [vmem:[#allocation2 + $0x49] sm:$0xff] %v59
  %76 = vst [vmem:[#allocation2 + $0x51] sm:$0xff] %v60
  %77 = vst [vmem:[#allocation2 + $0x61] sm:$0xff] %v61
  %78 = vst [vmem:[#allocation2 + $0x69] sm:$0xff] %v62
  %79 = vst [vmem:[#allocation2 + $0x79] sm:$0xff] %v63
  %80 = vst [vmem:[#allocation2 + $0x81] sm:$0xff] %v64
  %81 = vst [vmem:[#allocation2 + $0x91] sm:$0xff] %v65
  %82 = vst [vmem:[#allocation2 + $0x99] sm:$0xff] %v66
  %83 = vst [vmem:[#allocation2 + $0xa9] sm:$0xff] %v67
  %84 = vst [vmem:[#allocation2 + $0xb1] sm:$0xff] %v68
  %v85 = vld [vmem:[#allocation2] sm:$0xff]
  %v86 = vld [vmem:[#allocation2 + $0x8] sm:$0xff]
  %v87 = vld [vmem:[#allocation2 + $0x18] sm:$0xff]
  %v88 = vld [vmem:[#allocation2 + $0x20] sm:$0xff]
  %v89 = vld [vmem:[#allocation2 + $0x30] sm:$0xff]
  %v90 = vld [vmem:[#allocation2 + $0x38] sm:$0xff]
  %v91 = vld [vmem:[#allocation2 + $0x48] sm:$0xff]
  %v92 = vld [vmem:[#allocation2 + $0x50] sm:$0xff]
  %v93 = vld [vmem:[#allocation2 + $0x60] sm:$0xff]
  %v94 = vld [vmem:[#allocation2 + $0x68] sm:$0xff]
  %v95 = vld [vmem:[#allocation2 + $0x78] sm:$0xff]
  %v96 = vld [vmem:[#allocation2 + $0x80] sm:$0xff]
  %v97 = vld [vmem:[#allocation2 + $0x90] sm:$0xff]
  %v98 = vld [vmem:[#allocation2 + $0x98] sm:$0xff]
  %v99 = vld [vmem:[#allocation2 + $0xa8] sm:$0xff]
  %v100 = vld [vmem:[#allocation2 + $0xb0] sm:$0xff]
  %v101 = vld [vmem:[%s1] sm:$0xff]
  %v102 = vld [vmem:[%s1 + $0x8] sm:$0xff]
  %v103 = vld [vmem:[%s1 + $0x10] sm:$0xff]
  %v104 = vld [vmem:[%s1 + $0x18] sm:$0xff]
  %v105 = vld [vmem:[%s1 + $0x20] sm:$0xff]
  %v106 = vld [vmem:[%s1 + $0x28] sm:$0xff]
  %v107 = vld [vmem:[%s1 + $0x30] sm:$0xff]
  %v108 = vld [vmem:[%s1 + $0x38] sm:$0xff]
  %v109 = vld [vmem:[%s1 + $0x40] sm:$0xff]
  %v110 = vld [vmem:[%s1 + $0x48] sm:$0xff]
  %v111 = vld [vmem:[%s1 + $0x50] sm:$0xff]
  %v112 = vld [vmem:[%s1 + $0x58] sm:$0xff]
  %v113 = vld [vmem:[%s1 + $0x60] sm:$0xff]
  %v114 = vld [vmem:[%s1 + $0x68] sm:$0xff]
  %v115 = vld [vmem:[%s1 + $0x70] sm:$0xff]
  %v116 = vld [vmem:[%s1 + $0x78] sm:$0xff]
  %v117 = vld [vmem:[#allocation2 + $0x1] sm:$0xff]
  %v118 = vld [vmem:[#allocation2 + $0x9] sm:$0xff]
  %v119 = vld [vmem:[#allocation2 + $0x19] sm:$0xff]
  %v120 = vld [vmem:[#allocation2 + $0x21] sm:$0xff]
  %v121 = vld [vmem:[#allocation2 + $0x31] sm:$0xff]
  %v122 = vld [vmem:[#allocation2 + $0x39] sm:$0xff]
  %v123 = vld [vmem:[#allocation2 + $0x49] sm:$0xff]
  %v124 = vld [vmem:[#allocation2 + $0x51] sm:$0xff]
  %v125 = vld [vmem:[#allocation2 + $0x61] sm:$0xff]
  %v126 = vld [vmem:[#allocation2 + $0x69] sm:$0xff]
  %v127 = vld [vmem:[#allocation2 + $0x79] sm:$0xff]
  %v128 = vld [vmem:[#allocation2 + $0x81] sm:$0xff]
  %v129 = vld [vmem:[#allocation2 + $0x91] sm:$0xff]
  %v130 = vld [vmem:[#allocation2 + $0x99] sm:$0xff]
  %v131 = vld [vmem:[#allocation2 + $0xa9] sm:$0xff]
  %v132 = vld [vmem:[#allocation2 + $0xb1] sm:$0xff]
  %s133 = scalar_lea.vmem %s1, 128
  %v134 = vld [vmem:[%s133] sm:$0xff]
  %v135 = vld [vmem:[%s133 + $0x8] sm:$0xff]
  %v136 = vld [vmem:[%s133 + $0x10] sm:$0xff]
  %v137 = vld [vmem:[%s133 + $0x18] sm:$0xff]
  %v138 = vld [vmem:[%s133 + $0x20] sm:$0xff]
  %v139 = vld [vmem:[%s133 + $0x28] sm:$0xff]
  %v140 = vld [vmem:[%s133 + $0x30] sm:$0xff]
  %v141 = vld [vmem:[%s133 + $0x38] sm:$0xff]
  %v142 = vld [vmem:[%s133 + $0x40] sm:$0xff]
  %v143 = vld [vmem:[%s133 + $0x48] sm:$0xff]
  %v144 = vld [vmem:[%s133 + $0x50] sm:$0xff]
  %v145 = vld [vmem:[%s133 + $0x58] sm:$0xff]
  %v146 = vld [vmem:[%s133 + $0x60] sm:$0xff]
  %v147 = vld [vmem:[%s133 + $0x68] sm:$0xff]
  %v148 = vld [vmem:[%s133 + $0x70] sm:$0xff]
  %v149 = vld [vmem:[%s133 + $0x78] sm:$0xff]
  %150 = vmatprep.subr.mxu0 0.0
  %151 = vmatpush1.msra.mxu0 %v149
  %152 = vmatprep.subr.mxu0 0.0
  %153 = vmatpush1.msra.mxu0 %v148
  %154 = vmatprep.subr.mxu0 0.0
  %155 = vmatpush1.msra.mxu0 %v147
  %156 = vmatprep.subr.mxu0 0.0
  %157 = vmatpush1.msra.mxu0 %v146
  %158 = vmatprep.subr.mxu0 0.0
  %159 = vmatpush1.msra.mxu0 %v145
  %160 = vmatprep.subr.mxu0 0.0
  %161 = vmatpush1.msra.mxu0 %v144
  %162 = vmatprep.subr.mxu0 0.0
  %163 = vmatpush1.msra.mxu0 %v143
  %164 = vmatprep.subr.mxu0 0.0
  %165 = vmatpush1.msra.mxu0 %v142
  %166 = vmatprep.subr.mxu0 0.0
  %167 = vmatpush1.msra.mxu0 %v141
  %168 = vmatprep.subr.mxu0 0.0
  %169 = vmatpush1.msra.mxu0 %v140
  %170 = vmatprep.subr.mxu0 0.0
  %171 = vmatpush1.msra.mxu0 %v139
  %172 = vmatprep.subr.mxu0 0.0
  %173 = vmatpush1.msra.mxu0 %v138
  %174 = vmatprep.subr.mxu0 0.0
  %175 = vmatpush1.msra.mxu0 %v137
  %176 = vmatprep.subr.mxu0 0.0
  %177 = vmatpush1.msra.mxu0 %v136
  %178 = vmatprep.subr.mxu0 0.0
  %179 = vmatpush1.msra.mxu0 %v135
  %180 = vmatprep.subr.mxu0 0.0
  %181 = vmatpush1.msra.mxu0 %v134
  %182 = vmatprep.subr.mxu0 0.0
  %183 = vmatpush2.msra.mxu0 0.0
  %184 = vmatprep.subr.mxu0 0.0
  %185 = vmatpush2.msra.mxu0 0.0
  %186 = vmatprep.subr.mxu0 0.0
  %187 = vmatpush2.msra.mxu0 0.0
  %188 = vmatprep.subr.mxu0 0.0
  %189 = vmatpush2.msra.mxu0 0.0
  %190 = vmatprep.subr.mxu0 0.0
  %191 = vmatpush2.msra.mxu0 0.0
  %192 = vmatprep.subr.mxu0 0.0
  %193 = vmatpush2.msra.mxu0 0.0
  %194 = vmatprep.subr.mxu0 0.0
  %195 = vmatpush2.msra.mxu0 0.0
  %196 = vmatprep.subr.mxu0 0.0
  %197 = vmatpush2.msra.mxu0 0.0
  %198 = vmatprep.subr.mxu0 0.0
  %199 = vmatpush2.msra.mxu0 0.0
  %200 = vmatprep.subr.mxu0 0.0
  %201 = vmatpush2.msra.mxu0 0.0
  %202 = vmatprep.subr.mxu0 0.0
  %203 = vmatpush2.msra.mxu0 0.0
  %204 = vmatprep.subr.mxu0 0.0
  %205 = vmatpush2.msra.mxu0 0.0
  %206 = vmatprep.subr.mxu0 0.0
  %207 = vmatpush2.msra.mxu0 0.0
  %208 = vmatprep.subr.mxu0 0.0
  %209 = vmatpush2.msra.mxu0 0.0
  %210 = vmatprep.subr.mxu0 0.0
  %211 = vmatpush2.msra.mxu0 0.0
  %212 = vmatprep.subr.mxu0 0.0
  %213 = vmatpush2.msra.mxu0 0.0
  %214 = vmatprep.mubr.f32.mxu0 0.0
  %215 = vmatmul.mubr.f32.gmra.mxu0 %v117
  %v216 = vpop.f32.mrf.mxu0
  %v217 = vadd.f32 0.0, %v216
  %v218 = vpop.f32.mrf.mxu0
  %219 = vmatprep.mubr.f32.mxu0 0.0
  %220 = vmatmul.mubr.f32.gmra.mxu0 %v118
  %v221 = vpop.f32.mrf.mxu0
  %v222 = vadd.f32 0.0, %v221
  %v223 = vpop.f32.mrf.mxu0
  %224 = vmatprep.mubr.f32.mxu0 0.0
  %225 = vmatmul.mubr.f32.gmra.mxu0 %v119
  %v226 = vpop.f32.mrf.mxu0
  %v227 = vadd.f32 0.0, %v226
  %v228 = vpop.f32.mrf.mxu0
  %229 = vmatprep.mubr.f32.mxu0 0.0
  %230 = vmatmul.mubr.f32.gmra.mxu0 %v120
  %v231 = vpop.f32.mrf.mxu0
  %v232 = vadd.f32 0.0, %v231
  %v233 = vpop.f32.mrf.mxu0
  %234 = vmatprep.mubr.f32.mxu0 0.0
  %235 = vmatmul.mubr.f32.gmra.mxu0 %v121
  %v236 = vpop.f32.mrf.mxu0
  %v237 = vadd.f32 0.0, %v236
  %v238 = vpop.f32.mrf.mxu0
  %239 = vmatprep.mubr.f32.mxu0 0.0
  %240 = vmatmul.mubr.f32.gmra.mxu0 %v122
  %v241 = vpop.f32.mrf.mxu0
  %v242 = vadd.f32 0.0, %v241
  %v243 = vpop.f32.mrf.mxu0
  %244 = vmatprep.mubr.f32.mxu0 0.0
  %245 = vmatmul.mubr.f32.gmra.mxu0 %v123
  %v246 = vpop.f32.mrf.mxu0
  %v247 = vadd.f32 0.0, %v246
  %v248 = vpop.f32.mrf.mxu0
  %249 = vmatprep.mubr.f32.mxu0 0.0
  %250 = vmatmul.mubr.f32.gmra.mxu0 %v124
  %v251 = vpop.f32.mrf.mxu0
  %v252 = vadd.f32 0.0, %v251
  %v253 = vpop.f32.mrf.mxu0
  %254 = vmatprep.mubr.f32.mxu0 0.0
  %255 = vmatmul.mubr.f32.gmra.mxu0 %v125
  %v256 = vpop.f32.mrf.mxu0
  %v257 = vadd.f32 0.0, %v256
  %v258 = vpop.f32.mrf.mxu0
  %259 = vmatprep.mubr.f32.mxu0 0.0
  %260 = vmatmul.mubr.f32.gmra.mxu0 %v126
  %v261 = vpop.f32.mrf.mxu0
  %v262 = vadd.f32 0.0, %v261
  %v263 = vpop.f32.mrf.mxu0
  %264 = vmatprep.mubr.f32.mxu0 0.0
  %265 = vmatmul.mubr.f32.gmra.mxu0 %v127
  %v266 = vpop.f32.mrf.mxu0
  %v267 = vadd.f32 0.0, %v266
  %v268 = vpop.f32.mrf.mxu0
  %269 = vmatprep.mubr.f32.mxu0 0.0
  %270 = vmatmul.mubr.f32.gmra.mxu0 %v128
  %v271 = vpop.f32.mrf.mxu0
  %v272 = vadd.f32 0.0, %v271
  %v273 = vpop.f32.mrf.mxu0
  %274 = vmatprep.mubr.f32.mxu0 0.0
  %275 = vmatmul.mubr.f32.gmra.mxu0 %v129
  %v276 = vpop.f32.mrf.mxu0
  %v277 = vadd.f32 0.0, %v276
  %v278 = vpop.f32.mrf.mxu0
  %279 = vmatprep.mubr.f32.mxu0 0.0
  %280 = vmatmul.mubr.f32.gmra.mxu0 %v130
  %v281 = vpop.f32.mrf.mxu0
  %v282 = vadd.f32 0.0, %v281
  %v283 = vpop.f32.mrf.mxu0
  %284 = vmatprep.mubr.f32.mxu0 0.0
  %285 = vmatmul.mubr.f32.gmra.mxu0 %v131
  %v286 = vpop.f32.mrf.mxu0
  %v287 = vadd.f32 0.0, %v286
  %v288 = vpop.f32.mrf.mxu0
  %289 = vmatprep.mubr.f32.mxu0 0.0
  %290 = vmatmul.mubr.f32.gmra.mxu0 %v132
  %v291 = vpop.f32.mrf.mxu0
  %v292 = vadd.f32 0.0, %v291
  %v293 = vpop.f32.mrf.mxu0
  %294 = vdwg.mxu0
  %295 = vmatprep.subr.mxu0 0.0
  %296 = vmatpush1.msra.mxu0 %v116
  %297 = vmatprep.subr.mxu0 0.0
  %298 = vmatpush1.msra.mxu0 %v115
  %299 = vmatprep.subr.mxu0 0.0
  %300 = vmatpush1.msra.mxu0 %v114
  %301 = vmatprep.subr.mxu0 0.0
  %302 = vmatpush1.msra.mxu0 %v113
  %303 = vmatprep.subr.mxu0 0.0
  %304 = vmatpush1.msra.mxu0 %v112
  %305 = vmatprep.subr.mxu0 0.0
  %306 = vmatpush1.msra.mxu0 %v111
  %307 = vmatprep.subr.mxu0 0.0
  %308 = vmatpush1.msra.mxu0 %v110
  %309 = vmatprep.subr.mxu0 0.0
  %310 = vmatpush1.msra.mxu0 %v109
  %311 = vmatprep.subr.mxu0 0.0
  %312 = vmatpush1.msra.mxu0 %v108
  %313 = vmatprep.subr.mxu0 0.0
  %314 = vmatpush1.msra.mxu0 %v107
  %315 = vmatprep.subr.mxu0 0.0
  %316 = vmatpush1.msra.mxu0 %v106
  %317 = vmatprep.subr.mxu0 0.0
  %318 = vmatpush1.msra.mxu0 %v105
  %319 = vmatprep.subr.mxu0 0.0
  %320 = vmatpush1.msra.mxu0 %v104
  %321 = vmatprep.subr.mxu0 0.0
  %322 = vmatpush1.msra.mxu0 %v103
  %323 = vmatprep.subr.mxu0 0.0
  %324 = vmatpush1.msra.mxu0 %v102
  %325 = vmatprep.subr.mxu0 0.0
  %326 = vmatpush1.msra.mxu0 %v101
  %327 = vmatprep.subr.mxu0 0.0
  %328 = vmatpush2.msra.mxu0 0.0
  %329 = vmatprep.subr.mxu0 0.0
  %330 = vmatpush2.msra.mxu0 0.0
  %331 = vmatprep.subr.mxu0 0.0
  %332 = vmatpush2.msra.mxu0 0.0
  %333 = vmatprep.subr.mxu0 0.0
  %334 = vmatpush2.msra.mxu0 0.0
  %335 = vmatprep.subr.mxu0 0.0
  %336 = vmatpush2.msra.mxu0 0.0
  %337 = vmatprep.subr.mxu0 0.0
  %338 = vmatpush2.msra.mxu0 0.0
  %339 = vmatprep.subr.mxu0 0.0
  %340 = vmatpush2.msra.mxu0 0.0
  %341 = vmatprep.subr.mxu0 0.0
  %342 = vmatpush2.msra.mxu0 0.0
  %343 = vmatprep.subr.mxu0 0.0
  %344 = vmatpush2.msra.mxu0 0.0
  %345 = vmatprep.subr.mxu0 0.0
  %346 = vmatpush2.msra.mxu0 0.0
  %347 = vmatprep.subr.mxu0 0.0
  %348 = vmatpush2.msra.mxu0 0.0
  %349 = vmatprep.subr.mxu0 0.0
  %350 = vmatpush2.msra.mxu0 0.0
  %351 = vmatprep.subr.mxu0 0.0
  %352 = vmatpush2.msra.mxu0 0.0
  %353 = vmatprep.subr.mxu0 0.0
  %354 = vmatpush2.msra.mxu0 0.0
  %355 = vmatprep.subr.mxu0 0.0
  %356 = vmatpush2.msra.mxu0 0.0
  %357 = vmatprep.subr.mxu0 0.0
  %358 = vmatpush2.msra.mxu0 0.0
  %359 = vmatprep.mubr.f32.mxu0 0.0
  %360 = vmatmul.mubr.f32.gmra.mxu0 %v85
  %v361 = vpop.f32.mrf.mxu0
  %v362 = vadd.f32 %v217, %v361
  %v363 = vpop.f32.mrf.mxu0
  %364 = vmatprep.mubr.f32.mxu0 0.0
  %365 = vmatmul.mubr.f32.gmra.mxu0 %v86
  %v366 = vpop.f32.mrf.mxu0
  %v367 = vadd.f32 %v222, %v366
  %v368 = vpop.f32.mrf.mxu0
  %369 = vmatprep.mubr.f32.mxu0 0.0
  %370 = vmatmul.mubr.f32.gmra.mxu0 %v87
  %v371 = vpop.f32.mrf.mxu0
  %v372 = vadd.f32 %v227, %v371
  %v373 = vpop.f32.mrf.mxu0
  %374 = vmatprep.mubr.f32.mxu0 0.0
  %375 = vmatmul.mubr.f32.gmra.mxu0 %v88
  %v376 = vpop.f32.mrf.mxu0
  %v377 = vadd.f32 %v232, %v376
  %v378 = vpop.f32.mrf.mxu0
  %379 = vmatprep.mubr.f32.mxu0 0.0
  %380 = vmatmul.mubr.f32.gmra.mxu0 %v89
  %v381 = vpop.f32.mrf.mxu0
  %v382 = vadd.f32 %v237, %v381
  %v383 = vpop.f32.mrf.mxu0
  %384 = vmatprep.mubr.f32.mxu0 0.0
  %385 = vmatmul.mubr.f32.gmra.mxu0 %v90
  %v386 = vpop.f32.mrf.mxu0
  %v387 = vadd.f32 %v242, %v386
  %v388 = vpop.f32.mrf.mxu0
  %389 = vmatprep.mubr.f32.mxu0 0.0
  %390 = vmatmul.mubr.f32.gmra.mxu0 %v91
  %v391 = vpop.f32.mrf.mxu0
  %v392 = vadd.f32 %v247, %v391
  %v393 = vpop.f32.mrf.mxu0
  %394 = vmatprep.mubr.f32.mxu0 0.0
  %395 = vmatmul.mubr.f32.gmra.mxu0 %v92
  %v396 = vpop.f32.mrf.mxu0
  %v397 = vadd.f32 %v252, %v396
  %v398 = vpop.f32.mrf.mxu0
  %399 = vmatprep.mubr.f32.mxu0 0.0
  %400 = vmatmul.mubr.f32.gmra.mxu0 %v93
  %v401 = vpop.f32.mrf.mxu0
  %v402 = vadd.f32 %v257, %v401
  %v403 = vpop.f32.mrf.mxu0
  %404 = vmatprep.mubr.f32.mxu0 0.0
  %405 = vmatmul.mubr.f32.gmra.mxu0 %v94
  %v406 = vpop.f32.mrf.mxu0
  %v407 = vadd.f32 %v262, %v406
  %v408 = vpop.f32.mrf.mxu0
  %409 = vmatprep.mubr.f32.mxu0 0.0
  %410 = vmatmul.mubr.f32.gmra.mxu0 %v95
  %v411 = vpop.f32.mrf.mxu0
  %v412 = vadd.f32 %v267, %v411
  %v413 = vpop.f32.mrf.mxu0
  %414 = vmatprep.mubr.f32.mxu0 0.0
  %415 = vmatmul.mubr.f32.gmra.mxu0 %v96
  %v416 = vpop.f32.mrf.mxu0
  %v417 = vadd.f32 %v272, %v416
  %v418 = vpop.f32.mrf.mxu0
  %419 = vmatprep.mubr.f32.mxu0 0.0
  %420 = vmatmul.mubr.f32.gmra.mxu0 %v97
  %v421 = vpop.f32.mrf.mxu0
  %v422 = vadd.f32 %v277, %v421
  %v423 = vpop.f32.mrf.mxu0
  %424 = vmatprep.mubr.f32.mxu0 0.0
  %425 = vmatmul.mubr.f32.gmra.mxu0 %v98
  %v426 = vpop.f32.mrf.mxu0
  %v427 = vadd.f32 %v282, %v426
  %v428 = vpop.f32.mrf.mxu0
  %429 = vmatprep.mubr.f32.mxu0 0.0
  %430 = vmatmul.mubr.f32.gmra.mxu0 %v99
  %v431 = vpop.f32.mrf.mxu0
  %v432 = vadd.f32 %v287, %v431
  %v433 = vpop.f32.mrf.mxu0
  %434 = vmatprep.mubr.f32.mxu0 0.0
  %435 = vmatmul.mubr.f32.gmra.mxu0 %v100
  %v436 = vpop.f32.mrf.mxu0
  %v437 = vadd.f32 %v292, %v436
  %v438 = vpop.f32.mrf.mxu0
  %439 = vdwg.mxu0
  %v440 = vld [vmem:[#allocation2 + $0x2] sm:$0xff]
  %v441 = vld [vmem:[#allocation2 + $0xa] sm:$0xff]
  %v442 = vld [vmem:[#allocation2 + $0x1a] sm:$0xff]
  %v443 = vld [vmem:[#allocation2 + $0x22] sm:$0xff]
  %v444 = vld [vmem:[#allocation2 + $0x32] sm:$0xff]
  %v445 = vld [vmem:[#allocation2 + $0x3a] sm:$0xff]
  %v446 = vld [vmem:[#allocation2 + $0x4a] sm:$0xff]
  %v447 = vld [vmem:[#allocation2 + $0x52] sm:$0xff]
  %v448 = vld [vmem:[#allocation2 + $0x62] sm:$0xff]
  %v449 = vld [vmem:[#allocation2 + $0x6a] sm:$0xff]
  %v450 = vld [vmem:[#allocation2 + $0x7a] sm:$0xff]
  %v451 = vld [vmem:[#allocation2 + $0x82] sm:$0xff]
  %v452 = vld [vmem:[#allocation2 + $0x92] sm:$0xff]
  %v453 = vld [vmem:[#allocation2 + $0x9a] sm:$0xff]
  %v454 = vld [vmem:[#allocation2 + $0xaa] sm:$0xff]
  %v455 = vld [vmem:[#allocation2 + $0xb2] sm:$0xff]
  %s456 = scalar_lea.vmem %s1, 256
  %v457 = vld [vmem:[%s456] sm:$0xff]
  %v458 = vld [vmem:[%s456 + $0x8] sm:$0xff]
  %v459 = vld [vmem:[%s456 + $0x10] sm:$0xff]
  %v460 = vld [vmem:[%s456 + $0x18] sm:$0xff]
  %v461 = vld [vmem:[%s456 + $0x20] sm:$0xff]
  %v462 = vld [vmem:[%s456 + $0x28] sm:$0xff]
  %v463 = vld [vmem:[%s456 + $0x30] sm:$0xff]
  %v464 = vld [vmem:[%s456 + $0x38] sm:$0xff]
  %v465 = vld [vmem:[%s456 + $0x40] sm:$0xff]
  %v466 = vld [vmem:[%s456 + $0x48] sm:$0xff]
  %v467 = vld [vmem:[%s456 + $0x50] sm:$0xff]
  %v468 = vld [vmem:[%s456 + $0x58] sm:$0xff]
  %v469 = vld [vmem:[%s456 + $0x60] sm:$0xff]
  %v470 = vld [vmem:[%s456 + $0x68] sm:$0xff]
  %v471 = vld [vmem:[%s456 + $0x70] sm:$0xff]
  %v472 = vld [vmem:[%s456 + $0x78] sm:$0xff]
  %473 = vmatprep.subr.mxu0 0.0
  %474 = vmatpush1.msra.mxu0 %v472
  %475 = vmatprep.subr.mxu0 0.0
  %476 = vmatpush1.msra.mxu0 %v471
  %477 = vmatprep.subr.mxu0 0.0
  %478 = vmatpush1.msra.mxu0 %v470
  %479 = vmatprep.subr.mxu0 0.0
  %480 = vmatpush1.msra.mxu0 %v469
  %481 = vmatprep.subr.mxu0 0.0
  %482 = vmatpush1.msra.mxu0 %v468
  %483 = vmatprep.subr.mxu0 0.0
  %484 = vmatpush1.msra.mxu0 %v467
  %485 = vmatprep.subr.mxu0 0.0
  %486 = vmatpush1.msra.mxu0 %v466
  %487 = vmatprep.subr.mxu0 0.0
  %488 = vmatpush1.msra.mxu0 %v465
  %489 = vmatprep.subr.mxu0 0.0
  %490 = vmatpush1.msra.mxu0 %v464
  %491 = vmatprep.subr.mxu0 0.0
  %492 = vmatpush1.msra.mxu0 %v463
  %493 = vmatprep.subr.mxu0 0.0
  %494 = vmatpush1.msra.mxu0 %v462
  %495 = vmatprep.subr.mxu0 0.0
  %496 = vmatpush1.msra.mxu0 %v461
  %497 = vmatprep.subr.mxu0 0.0
  %498 = vmatpush1.msra.mxu0 %v460
  %499 = vmatprep.subr.mxu0 0.0
  %500 = vmatpush1.msra.mxu0 %v459
  %501 = vmatprep.subr.mxu0 0.0
  %502 = vmatpush1.msra.mxu0 %v458
  %503 = vmatprep.subr.mxu0 0.0
  %504 = vmatpush1.msra.mxu0 %v457
  %505 = vmatprep.subr.mxu0 0.0
  %506 = vmatpush2.msra.mxu0 0.0
  %507 = vmatprep.subr.mxu0 0.0
  %508 = vmatpush2.msra.mxu0 0.0
  %509 = vmatprep.subr.mxu0 0.0
  %510 = vmatpush2.msra.mxu0 0.0
  %511 = vmatprep.subr.mxu0 0.0
  %512 = vmatpush2.msra.mxu0 0.0
  %513 = vmatprep.subr.mxu0 0.0
  %514 = vmatpush2.msra.mxu0 0.0
  %515 = vmatprep.subr.mxu0 0.0
  %516 = vmatpush2.msra.mxu0 0.0
  %517 = vmatprep.subr.mxu0 0.0
  %518 = vmatpush2.msra.mxu0 0.0
  %519 = vmatprep.subr.mxu0 0.0
  %520 = vmatpush2.msra.mxu0 0.0
  %521 = vmatprep.subr.mxu0 0.0
  %522 = vmatpush2.msra.mxu0 0.0
  %523 = vmatprep.subr.mxu0 0.0
  %524 = vmatpush2.msra.mxu0 0.0
  %525 = vmatprep.subr.mxu0 0.0
  %526 = vmatpush2.msra.mxu0 0.0
  %527 = vmatprep.subr.mxu0 0.0
  %528 = vmatpush2.msra.mxu0 0.0
  %529 = vmatprep.subr.mxu0 0.0
  %530 = vmatpush2.msra.mxu0 0.0
  %531 = vmatprep.subr.mxu0 0.0
  %532 = vmatpush2.msra.mxu0 0.0
  %533 = vmatprep.subr.mxu0 0.0
  %534 = vmatpush2.msra.mxu0 0.0
  %535 = vmatprep.subr.mxu0 0.0
  %536 = vmatpush2.msra.mxu0 0.0
  %537 = vmatprep.mubr.f32.mxu0 0.0
  %538 = vmatmul.mubr.f32.gmra.mxu0 %v440
  %v539 = vpop.f32.mrf.mxu0
  %v540 = vadd.f32 0.0, %v539
  %v541 = vpop.f32.mrf.mxu0
  %542 = vmatprep.mubr.f32.mxu0 0.0
  %543 = vmatmul.mubr.f32.gmra.mxu0 %v441
  %v544 = vpop.f32.mrf.mxu0
  %v545 = vadd.f32 0.0, %v544
  %v546 = vpop.f32.mrf.mxu0
  %547 = vmatprep.mubr.f32.mxu0 0.0
  %548 = vmatmul.mubr.f32.gmra.mxu0 %v442
  %v549 = vpop.f32.mrf.mxu0
  %v550 = vadd.f32 0.0, %v549
  %v551 = vpop.f32.mrf.mxu0
  %552 = vmatprep.mubr.f32.mxu0 0.0
  %553 = vmatmul.mubr.f32.gmra.mxu0 %v443
  %v554 = vpop.f32.mrf.mxu0
  %v555 = vadd.f32 0.0, %v554
  %v556 = vpop.f32.mrf.mxu0
  %557 = vmatprep.mubr.f32.mxu0 0.0
  %558 = vmatmul.mubr.f32.gmra.mxu0 %v444
  %v559 = vpop.f32.mrf.mxu0
  %v560 = vadd.f32 0.0, %v559
  %v561 = vpop.f32.mrf.mxu0
  %562 = vmatprep.mubr.f32.mxu0 0.0
  %563 = vmatmul.mubr.f32.gmra.mxu0 %v445
  %v564 = vpop.f32.mrf.mxu0
  %v565 = vadd.f32 0.0, %v564
  %v566 = vpop.f32.mrf.mxu0
  %567 = vmatprep.mubr.f32.mxu0 0.0
  %568 = vmatmul.mubr.f32.gmra.mxu0 %v446
  %v569 = vpop.f32.mrf.mxu0
  %v570 = vadd.f32 0.0, %v569
  %v571 = vpop.f32.mrf.mxu0
  %572 = vmatprep.mubr.f32.mxu0 0.0
  %573 = vmatmul.mubr.f32.gmra.mxu0 %v447
  %v574 = vpop.f32.mrf.mxu0
  %v575 = vadd.f32 0.0, %v574
  %v576 = vpop.f32.mrf.mxu0
  %577 = vmatprep.mubr.f32.mxu0 0.0
  %578 = vmatmul.mubr.f32.gmra.mxu0 %v448
  %v579 = vpop.f32.mrf.mxu0
  %v580 = vadd.f32 0.0, %v579
  %v581 = vpop.f32.mrf.mxu0
  %582 = vmatprep.mubr.f32.mxu0 0.0
  %583 = vmatmul.mubr.f32.gmra.mxu0 %v449
  %v584 = vpop.f32.mrf.mxu0
  %v585 = vadd.f32 0.0, %v584
  %v586 = vpop.f32.mrf.mxu0
  %587 = vmatprep.mubr.f32.mxu0 0.0
  %588 = vmatmul.mubr.f32.gmra.mxu0 %v450
  %v589 = vpop.f32.mrf.mxu0
  %v590 = vadd.f32 0.0, %v589
  %v591 = vpop.f32.mrf.mxu0
  %592 = vmatprep.mubr.f32.mxu0 0.0
  %593 = vmatmul.mubr.f32.gmra.mxu0 %v451
  %v594 = vpop.f32.mrf.mxu0
  %v595 = vadd.f32 0.0, %v594
  %v596 = vpop.f32.mrf.mxu0
  %597 = vmatprep.mubr.f32.mxu0 0.0
  %598 = vmatmul.mubr.f32.gmra.mxu0 %v452
  %v599 = vpop.f32.mrf.mxu0
  %v600 = vadd.f32 0.0, %v599
  %v601 = vpop.f32.mrf.mxu0
  %602 = vmatprep.mubr.f32.mxu0 0.0
  %603 = vmatmul.mubr.f32.gmra.mxu0 %v453
  %v604 = vpop.f32.mrf.mxu0
  %v605 = vadd.f32 0.0, %v604
  %v606 = vpop.f32.mrf.mxu0
  %607 = vmatprep.mubr.f32.mxu0 0.0
  %608 = vmatmul.mubr.f32.gmra.mxu0 %v454
  %v609 = vpop.f32.mrf.mxu0
  %v610 = vadd.f32 0.0, %v609
  %v611 = vpop.f32.mrf.mxu0
  %612 = vmatprep.mubr.f32.mxu0 0.0
  %613 = vmatmul.mubr.f32.gmra.mxu0 %v455
  %v614 = vpop.f32.mrf.mxu0
  %v615 = vadd.f32 0.0, %v614
  %v616 = vpop.f32.mrf.mxu0
  %617 = vdwg.mxu0
  %v618 = vadd.f32 %v362, %v540
  %v619 = vadd.f32 %v367, %v545
  %v620 = vadd.f32 %v372, %v550
  %v621 = vadd.f32 %v377, %v555
  %v622 = vadd.f32 %v382, %v560
  %v623 = vadd.f32 %v387, %v565
  %v624 = vadd.f32 %v392, %v570
  %v625 = vadd.f32 %v397, %v575
  %v626 = vadd.f32 %v402, %v580
  %v627 = vadd.f32 %v407, %v585
  %v628 = vadd.f32 %v412, %v590
  %v629 = vadd.f32 %v417, %v595
  %v630 = vadd.f32 %v422, %v600
  %v631 = vadd.f32 %v427, %v605
  %v632 = vadd.f32 %v432, %v610
  %v633 = vadd.f32 %v437, %v615
  %v634 = vld [vmem:[%s4] sm:$0x1]
  %v635 = vld [vmem:[%s5] sm:$0x1]
  %v636 = vadd.f32 %v618, %v619
  %v637 = vadd.f32 %v636, %v620
  %v638 = vadd.f32 %v637, %v621
  %v639 = vadd.f32 %v638, %v622
  %v640 = vadd.f32 %v639, %v623
  %v641 = vadd.f32 %v640, %v624
  %v642 = vadd.f32 %v641, %v625
  %v643 = vadd.f32 %v642, %v626
  %v644 = vadd.f32 %v643, %v627
  %v645 = vadd.f32 %v644, %v628
  %v646 = vadd.f32 %v645, %v629
  %v647 = vadd.f32 %v646, %v630
  %v648 = vadd.f32 %v647, %v631
  %v649 = vadd.f32 %v648, %v632
  %v650 = vadd.f32 %v649, %v633
  %v651 = vrot.slane %v650, 4
  %v652 = vadd.f32 %v650, %v651
  %v653 = vrot.slane %v652, 2
  %v654 = vadd.f32 %v652, %v653
  %v655 = vrot.slane %v654, 1
  %v656 = vadd.f32 %v654, %v655
  %v657 = vmul.f32 %v618, %v618
  %v658 = vmul.f32 %v619, %v619
  %v659 = vmul.f32 %v620, %v620
  %v660 = vmul.f32 %v621, %v621
  %v661 = vmul.f32 %v622, %v622
  %v662 = vmul.f32 %v623, %v623
  %v663 = vmul.f32 %v624, %v624
  %v664 = vmul.f32 %v625, %v625
  %v665 = vmul.f32 %v626, %v626
  %v666 = vmul.f32 %v627, %v627
  %v667 = vmul.f32 %v628, %v628
  %v668 = vmul.f32 %v629, %v629
  %v669 = vmul.f32 %v630, %v630
  %v670 = vmul.f32 %v631, %v631
  %v671 = vmul.f32 %v632, %v632
  %v672 = vmul.f32 %v633, %v633
  %v673 = vadd.f32 %v657, %v658
  %v674 = vadd.f32 %v673, %v659
  %v675 = vadd.f32 %v674, %v660
  %v676 = vadd.f32 %v675, %v661
  %v677 = vadd.f32 %v676, %v662
  %v678 = vadd.f32 %v677, %v663
  %v679 = vadd.f32 %v678, %v664
  %v680 = vadd.f32 %v679, %v665
  %v681 = vadd.f32 %v680, %v666
  %v682 = vadd.f32 %v681, %v667
  %v683 = vadd.f32 %v682, %v668
  %v684 = vadd.f32 %v683, %v669
  %v685 = vadd.f32 %v684, %v670
  %v686 = vadd.f32 %v685, %v671
  %v687 = vadd.f32 %v686, %v672
  %v688 = vrot.slane %v687, 4
  %v689 = vadd.f32 %v687, %v688
  %v690 = vrot.slane %v689, 2
  %v691 = vadd.f32 %v689, %v690
  %v692 = vrot.slane %v691, 1
  %v693 = vadd.f32 %v691, %v692
  %vm694 = vcmask 1040384
  %v695 = vsel %vm694, %v656, %v693
  %v696 = vld [vmem:[%s3] sm:$0xff]
  %v697 = vld [vmem:[%s3 + $0x8] sm:$0xff]
  %v698 = vld [vmem:[%s3 + $0x10] sm:$0xff]
  %v699 = vld [vmem:[%s3 + $0x18] sm:$0xff]
  %v700 = vld [vmem:[%s3 + $0x20] sm:$0xff]
  %v701 = vld [vmem:[%s3 + $0x28] sm:$0xff]
  %v702 = vld [vmem:[%s3 + $0x30] sm:$0xff]
  %v703 = vld [vmem:[%s3 + $0x38] sm:$0xff]
  %v704 = vld [vmem:[%s3 + $0x40] sm:$0xff]
  %v705 = vld [vmem:[%s3 + $0x48] sm:$0xff]
  %v706 = vld [vmem:[%s3 + $0x50] sm:$0xff]
  %v707 = vld [vmem:[%s3 + $0x58] sm:$0xff]
  %v708 = vld [vmem:[%s3 + $0x60] sm:$0xff]
  %v709 = vld [vmem:[%s3 + $0x68] sm:$0xff]
  %v710 = vld [vmem:[%s3 + $0x70] sm:$0xff]
  %v711 = vld [vmem:[%s3 + $0x78] sm:$0xff]
  %712 = vmatprep.subr.mxu0 0.0
  %713 = vmatpush1.msra.mxu0 %v711
  %714 = vmatprep.subr.mxu0 0.0
  %715 = vmatpush1.msra.mxu0 %v710
  %716 = vmatprep.subr.mxu0 0.0
  %717 = vmatpush1.msra.mxu0 %v709
  %718 = vmatprep.subr.mxu0 0.0
  %719 = vmatpush1.msra.mxu0 %v708
  %720 = vmatprep.subr.mxu0 0.0
  %721 = vmatpush1.msra.mxu0 %v707
  %722 = vmatprep.subr.mxu0 0.0
  %723 = vmatpush1.msra.mxu0 %v706
  %724 = vmatprep.subr.mxu0 0.0
  %725 = vmatpush1.msra.mxu0 %v705
  %726 = vmatprep.subr.mxu0 0.0
  %727 = vmatpush1.msra.mxu0 %v704
  %728 = vmatprep.subr.mxu0 0.0
  %729 = vmatpush1.msra.mxu0 %v703
  %730 = vmatprep.subr.mxu0 0.0
  %731 = vmatpush1.msra.mxu0 %v702
  %732 = vmatprep.subr.mxu0 0.0
  %733 = vmatpush1.msra.mxu0 %v701
  %734 = vmatprep.subr.mxu0 0.0
  %735 = vmatpush1.msra.mxu0 %v700
  %736 = vmatprep.subr.mxu0 0.0
  %737 = vmatpush1.msra.mxu0 %v699
  %738 = vmatprep.subr.mxu0 0.0
  %739 = vmatpush1.msra.mxu0 %v698
  %740 = vmatprep.subr.mxu0 0.0
  %741 = vmatpush1.msra.mxu0 %v697
  %742 = vmatprep.subr.mxu0 0.0
  %743 = vmatpush1.msra.mxu0 %v696
  %744 = vmatprep.subr.mxu0 0.0
  %745 = vmatpush2.msra.mxu0 0.0
  %746 = vmatprep.subr.mxu0 0.0
  %747 = vmatpush2.msra.mxu0 0.0
  %748 = vmatprep.subr.mxu0 0.0
  %749 = vmatpush2.msra.mxu0 0.0
  %750 = vmatprep.subr.mxu0 0.0
  %751 = vmatpush2.msra.mxu0 0.0
  %752 = vmatprep.subr.mxu0 0.0
  %753 = vmatpush2.msra.mxu0 0.0
  %754 = vmatprep.subr.mxu0 0.0
  %755 = vmatpush2.msra.mxu0 0.0
  %756 = vmatprep.subr.mxu0 0.0
  %757 = vmatpush2.msra.mxu0 0.0
  %758 = vmatprep.subr.mxu0 0.0
  %759 = vmatpush2.msra.mxu0 0.0
  %760 = vmatprep.subr.mxu0 0.0
  %761 = vmatpush2.msra.mxu0 0.0
  %762 = vmatprep.subr.mxu0 0.0
  %763 = vmatpush2.msra.mxu0 0.0
  %764 = vmatprep.subr.mxu0 0.0
  %765 = vmatpush2.msra.mxu0 0.0
  %766 = vmatprep.subr.mxu0 0.0
  %767 = vmatpush2.msra.mxu0 0.0
  %768 = vmatprep.subr.mxu0 0.0
  %769 = vmatpush2.msra.mxu0 0.0
  %770 = vmatprep.subr.mxu0 0.0
  %771 = vmatpush2.msra.mxu0 0.0
  %772 = vmatprep.subr.mxu0 0.0
  %773 = vmatpush2.msra.mxu0 0.0
  %774 = vmatprep.subr.mxu0 0.0
  %775 = vmatpush2.msra.mxu0 0.0
  %776 = vmatprep.mubr.f32.mxu0 0.0
  %777 = vmatmul.mubr.f32.gmra.mxu0 %v695
  %v778 = vpop.f32.mrf.mxu0
  %v779 = vadd.f32 0.0, %v778
  %v780 = vpop.f32.mrf.mxu0
  %781 = vdwg.mxu0
  %v782 = vmul.f32 %v779, %v779
  %v784 = vrot.slane %v782, 7
  %v786 = vsub.f32 %v779, %v784
  %v787 = vlaneseq
  %v788 = vshrl.u32 %v787, 7
  %v789 = vsub.s32 0, %v788
  %v790 = vrot.slane %v779, %v789
  %v791 = vsub.f32 %v618, %v790
  %v792 = vsub.f32 %v619, %v790
  %v793 = vsub.f32 %v620, %v790
  %v794 = vsub.f32 %v621, %v790
  %v795 = vsub.f32 %v622, %v790
  %v796 = vsub.f32 %v623, %v790
  %v797 = vsub.f32 %v624, %v790
  %v798 = vsub.f32 %v625, %v790
  %v799 = vsub.f32 %v626, %v790
  %v800 = vsub.f32 %v627, %v790
  %v801 = vsub.f32 %v628, %v790
  %v802 = vsub.f32 %v629, %v790
  %v803 = vsub.f32 %v630, %v790
  %v804 = vsub.f32 %v631, %v790
  %v805 = vsub.f32 %v632, %v790
  %v806 = vsub.f32 %v633, %v790
  %v807 = vadd.f32 %v786, 1e-05
  %v808 = vrsqrt.pop %v807
  %v811 = vunpack.c.l.s4 1966171168
  %v812 = vunpack.c.0.s8 %v811
  %v813 = vlaneseq
  %v814 = vshrl.u32 %v813, 7
  %v815 = vsub.s32 %v812, %v814
  %v816 = vrot.slane %v808, %v815
  %v817 = vcombine.high %v816, %v816
  %v819 = vunpack.c.l.s4 1966171168
  %v820 = vunpack.c.0.s8 %v819
  %v821 = vlaneseq
  %v822 = vshrl.u32 %v821, 7
  %v823 = vsub.s32 %v820, %v822
  %v824 = vrot.slane %v817, %v823
  %v826 = vmul.f32 %v634, %v824
  %v828 = vlaneseq
  %v829 = vshrl.u32 %v828, 7
  %v830 = vsub.s32 0, %v829
  %v831 = vrot.slane %v826, %v830
  %v833 = vmul.f32 %v791, %v831
  %v834 = vmul.f32 %v792, %v831
  %v835 = vmul.f32 %v793, %v831
  %v836 = vmul.f32 %v794, %v831
  %v837 = vmul.f32 %v795, %v831
  %v838 = vmul.f32 %v796, %v831
  %v839 = vmul.f32 %v797, %v831
  %v840 = vmul.f32 %v798, %v831
  %v841 = vmul.f32 %v799, %v831
  %v842 = vmul.f32 %v800, %v831
  %v843 = vmul.f32 %v801, %v831
  %v844 = vmul.f32 %v802, %v831
  %v845 = vmul.f32 %v803, %v831
  %v846 = vmul.f32 %v804, %v831
  %v847 = vmul.f32 %v805, %v831
  %v848 = vmul.f32 %v806, %v831
  %v850 = vlaneseq
  %v851 = vshrl.u32 %v850, 7
  %v852 = vsub.s32 0, %v851
  %v853 = vrot.slane %v635, %v852
  %v855 = vadd.f32 %v833, %v853
  %v856 = vadd.f32 %v834, %v853
  %v857 = vadd.f32 %v835, %v853
  %v858 = vadd.f32 %v836, %v853
  %v859 = vadd.f32 %v837, %v853
  %v860 = vadd.f32 %v838, %v853
  %v861 = vadd.f32 %v839, %v853
  %v862 = vadd.f32 %v840, %v853
  %v863 = vadd.f32 %v841, %v853
  %v864 = vadd.f32 %v842, %v853
  %v865 = vadd.f32 %v843, %v853
  %v866 = vadd.f32 %v844, %v853
  %v867 = vadd.f32 %v845, %v853
  %v868 = vadd.f32 %v846, %v853
  %v869 = vadd.f32 %v847, %v853
  %v870 = vadd.f32 %v848, %v853
  %v871 = vmax.f32 %v855, 0.0
  %v872 = vmax.f32 %v856, 0.0
  %v873 = vmax.f32 %v857, 0.0
  %v874 = vmax.f32 %v858, 0.0
  %v875 = vmax.f32 %v859, 0.0
  %v876 = vmax.f32 %v860, 0.0
  %v877 = vmax.f32 %v861, 0.0
  %v878 = vmax.f32 %v862, 0.0
  %v879 = vmax.f32 %v863, 0.0
  %v880 = vmax.f32 %v864, 0.0
  %v881 = vmax.f32 %v865, 0.0
  %v882 = vmax.f32 %v866, 0.0
  %v883 = vmax.f32 %v867, 0.0
  %v884 = vmax.f32 %v868, 0.0
  %v885 = vmax.f32 %v869, 0.0
  %v886 = vmax.f32 %v870, 0.0
  %887 = vst [vmem:[#allocation2 + $0x1] sm:$0xff] %v871
  %888 = vst [vmem:[#allocation2 + $0x9] sm:$0xff] %v872
  %889 = vst [vmem:[#allocation2 + $0x19] sm:$0xff] %v873
  %890 = vst [vmem:[#allocation2 + $0x21] sm:$0xff] %v874
  %891 = vst [vmem:[#allocation2 + $0x31] sm:$0xff] %v875
  %892 = vst [vmem:[#allocation2 + $0x39] sm:$0xff] %v876
  %893 = vst [vmem:[#allocation2 + $0x49] sm:$0xff] %v877
  %894 = vst [vmem:[#allocation2 + $0x51] sm:$0xff] %v878
  %895 = vst [vmem:[#allocation2 + $0x61] sm:$0xff] %v879
  %896 = vst [vmem:[#allocation2 + $0x69] sm:$0xff] %v880
  %897 = vst [vmem:[#allocation2 + $0x79] sm:$0xff] %v881
  %898 = vst [vmem:[#allocation2 + $0x81] sm:$0xff] %v882
  %899 = vst [vmem:[#allocation2 + $0x91] sm:$0xff] %v883
  %900 = vst [vmem:[#allocation2 + $0x99] sm:$0xff] %v884
  %901 = vst [vmem:[#allocation2 + $0xa9] sm:$0xff] %v885
  %902 = vst [vmem:[#allocation2 + $0xb1] sm:$0xff] %v886
  %v903 = vld [vmem:[#allocation2] sm:$0xff]
  %v904 = vld [vmem:[#allocation2 + $0x8] sm:$0xff]
  %v905 = vld [vmem:[#allocation2 + $0x18] sm:$0xff]
  %v906 = vld [vmem:[#allocation2 + $0x20] sm:$0xff]
  %v907 = vld [vmem:[#allocation2 + $0x30] sm:$0xff]
  %v908 = vld [vmem:[#allocation2 + $0x38] sm:$0xff]
  %v909 = vld [vmem:[#allocation2 + $0x48] sm:$0xff]
  %v910 = vld [vmem:[#allocation2 + $0x50] sm:$0xff]
  %v911 = vld [vmem:[#allocation2 + $0x60] sm:$0xff]
  %v912 = vld [vmem:[#allocation2 + $0x68] sm:$0xff]
  %v913 = vld [vmem:[#allocation2 + $0x78] sm:$0xff]
  %v914 = vld [vmem:[#allocation2 + $0x80] sm:$0xff]
  %v915 = vld [vmem:[#allocation2 + $0x90] sm:$0xff]
  %v916 = vld [vmem:[#allocation2 + $0x98] sm:$0xff]
  %v917 = vld [vmem:[#allocation2 + $0xa8] sm:$0xff]
  %v918 = vld [vmem:[#allocation2 + $0xb0] sm:$0xff]
  %v919 = vld [vmem:[%s2] sm:$0xff]
  %v920 = vld [vmem:[%s2 + $0x8] sm:$0xff]
  %v921 = vld [vmem:[%s2 + $0x10] sm:$0xff]
  %v922 = vld [vmem:[%s2 + $0x18] sm:$0xff]
  %v923 = vld [vmem:[%s2 + $0x20] sm:$0xff]
  %v924 = vld [vmem:[%s2 + $0x28] sm:$0xff]
  %v925 = vld [vmem:[%s2 + $0x30] sm:$0xff]
  %v926 = vld [vmem:[%s2 + $0x38] sm:$0xff]
  %v927 = vld [vmem:[%s2 + $0x40] sm:$0xff]
  %v928 = vld [vmem:[%s2 + $0x48] sm:$0xff]
  %v929 = vld [vmem:[%s2 + $0x50] sm:$0xff]
  %v930 = vld [vmem:[%s2 + $0x58] sm:$0xff]
  %v931 = vld [vmem:[%s2 + $0x60] sm:$0xff]
  %v932 = vld [vmem:[%s2 + $0x68] sm:$0xff]
  %v933 = vld [vmem:[%s2 + $0x70] sm:$0xff]
  %v934 = vld [vmem:[%s2 + $0x78] sm:$0xff]
  %v935 = vld [vmem:[#allocation2 + $0x1] sm:$0xff]
  %v936 = vld [vmem:[#allocation2 + $0x9] sm:$0xff]
  %v937 = vld [vmem:[#allocation2 + $0x19] sm:$0xff]
  %v938 = vld [vmem:[#allocation2 + $0x21] sm:$0xff]
  %v939 = vld [vmem:[#allocation2 + $0x31] sm:$0xff]
  %v940 = vld [vmem:[#allocation2 + $0x39] sm:$0xff]
  %v941 = vld [vmem:[#allocation2 + $0x49] sm:$0xff]
  %v942 = vld [vmem:[#allocation2 + $0x51] sm:$0xff]
  %v943 = vld [vmem:[#allocation2 + $0x61] sm:$0xff]
  %v944 = vld [vmem:[#allocation2 + $0x69] sm:$0xff]
  %v945 = vld [vmem:[#allocation2 + $0x79] sm:$0xff]
  %v946 = vld [vmem:[#allocation2 + $0x81] sm:$0xff]
  %v947 = vld [vmem:[#allocation2 + $0x91] sm:$0xff]
  %v948 = vld [vmem:[#allocation2 + $0x99] sm:$0xff]
  %v949 = vld [vmem:[#allocation2 + $0xa9] sm:$0xff]
  %v950 = vld [vmem:[#allocation2 + $0xb1] sm:$0xff]
  %s951 = scalar_lea.vmem %s2, 128
  %v952 = vld [vmem:[%s951] sm:$0xff]
  %v953 = vld [vmem:[%s951 + $0x8] sm:$0xff]
  %v954 = vld [vmem:[%s951 + $0x10] sm:$0xff]
  %v955 = vld [vmem:[%s951 + $0x18] sm:$0xff]
  %v956 = vld [vmem:[%s951 + $0x20] sm:$0xff]
  %v957 = vld [vmem:[%s951 + $0x28] sm:$0xff]
  %v958 = vld [vmem:[%s951 + $0x30] sm:$0xff]
  %v959 = vld [vmem:[%s951 + $0x38] sm:$0xff]
  %v960 = vld [vmem:[%s951 + $0x40] sm:$0xff]
  %v961 = vld [vmem:[%s951 + $0x48] sm:$0xff]
  %v962 = vld [vmem:[%s951 + $0x50] sm:$0xff]
  %v963 = vld [vmem:[%s951 + $0x58] sm:$0xff]
  %v964 = vld [vmem:[%s951 + $0x60] sm:$0xff]
  %v965 = vld [vmem:[%s951 + $0x68] sm:$0xff]
  %v966 = vld [vmem:[%s951 + $0x70] sm:$0xff]
  %v967 = vld [vmem:[%s951 + $0x78] sm:$0xff]
  %968 = vmatprep.subr.mxu0 0.0
  %969 = vmatpush1.msra.mxu0 %v967
  %970 = vmatprep.subr.mxu0 0.0
  %971 = vmatpush1.msra.mxu0 %v966
  %972 = vmatprep.subr.mxu0 0.0
  %973 = vmatpush1.msra.mxu0 %v965
  %974 = vmatprep.subr.mxu0 0.0
  %975 = vmatpush1.msra.mxu0 %v964
  %976 = vmatprep.subr.mxu0 0.0
  %977 = vmatpush1.msra.mxu0 %v963
  %978 = vmatprep.subr.mxu0 0.0
  %979 = vmatpush1.msra.mxu0 %v962
  %980 = vmatprep.subr.mxu0 0.0
  %981 = vmatpush1.msra.mxu0 %v961
  %982 = vmatprep.subr.mxu0 0.0
  %983 = vmatpush1.msra.mxu0 %v960
  %984 = vmatprep.subr.mxu0 0.0
  %985 = vmatpush1.msra.mxu0 %v959
  %986 = vmatprep.subr.mxu0 0.0
  %987 = vmatpush1.msra.mxu0 %v958
  %988 = vmatprep.subr.mxu0 0.0
  %989 = vmatpush1.msra.mxu0 %v957
  %990 = vmatprep.subr.mxu0 0.0
  %991 = vmatpush1.msra.mxu0 %v956
  %992 = vmatprep.subr.mxu0 0.0
  %993 = vmatpush1.msra.mxu0 %v955
  %994 = vmatprep.subr.mxu0 0.0
  %995 = vmatpush1.msra.mxu0 %v954
  %996 = vmatprep.subr.mxu0 0.0
  %997 = vmatpush1.msra.mxu0 %v953
  %998 = vmatprep.subr.mxu0 0.0
  %999 = vmatpush1.msra.mxu0 %v952
  %1000 = vmatprep.subr.mxu0 0.0
  %1001 = vmatpush2.msra.mxu0 0.0
  %1002 = vmatprep.subr.mxu0 0.0
  %1003 = vmatpush2.msra.mxu0 0.0
  %1004 = vmatprep.subr.mxu0 0.0
  %1005 = vmatpush2.msra.mxu0 0.0
  %1006 = vmatprep.subr.mxu0 0.0
  %1007 = vmatpush2.msra.mxu0 0.0
  %1008 = vmatprep.subr.mxu0 0.0
  %1009 = vmatpush2.msra.mxu0 0.0
  %1010 = vmatprep.subr.mxu0 0.0
  %1011 = vmatpush2.msra.mxu0 0.0
  %1012 = vmatprep.subr.mxu0 0.0
  %1013 = vmatpush2.msra.mxu0 0.0
  %1014 = vmatprep.subr.mxu0 0.0
  %1015 = vmatpush2.msra.mxu0 0.0
  %1016 = vmatprep.subr.mxu0 0.0
  %1017 = vmatpush2.msra.mxu0 0.0
  %1018 = vmatprep.subr.mxu0 0.0
  %1019 = vmatpush2.msra.mxu0 0.0
  %1020 = vmatprep.subr.mxu0 0.0
  %1021 = vmatpush2.msra.mxu0 0.0
  %1022 = vmatprep.subr.mxu0 0.0
  %1023 = vmatpush2.msra.mxu0 0.0
  %1024 = vmatprep.subr.mxu0 0.0
  %1025 = vmatpush2.msra.mxu0 0.0
  %1026 = vmatprep.subr.mxu0 0.0
  %1027 = vmatpush2.msra.mxu0 0.0
  %1028 = vmatprep.subr.mxu0 0.0
  %1029 = vmatpush2.msra.mxu0 0.0
  %1030 = vmatprep.subr.mxu0 0.0
  %1031 = vmatpush2.msra.mxu0 0.0
  %1032 = vmatprep.mubr.f32.mxu0 0.0
  %1033 = vmatmul.mubr.f32.gmra.mxu0 %v935
  %v1034 = vpop.f32.mrf.mxu0
  %v1035 = vadd.f32 0.0, %v1034
  %v1036 = vpop.f32.mrf.mxu0
  %1037 = vmatprep.mubr.f32.mxu0 0.0
  %1038 = vmatmul.mubr.f32.gmra.mxu0 %v936
  %v1039 = vpop.f32.mrf.mxu0
  %v1040 = vadd.f32 0.0, %v1039
  %v1041 = vpop.f32.mrf.mxu0
  %1042 = vmatprep.mubr.f32.mxu0 0.0
  %1043 = vmatmul.mubr.f32.gmra.mxu0 %v937
  %v1044 = vpop.f32.mrf.mxu0
  %v1045 = vadd.f32 0.0, %v1044
  %v1046 = vpop.f32.mrf.mxu0
  %1047 = vmatprep.mubr.f32.mxu0 0.0
  %1048 = vmatmul.mubr.f32.gmra.mxu0 %v938
  %v1049 = vpop.f32.mrf.mxu0
  %v1050 = vadd.f32 0.0, %v1049
  %v1051 = vpop.f32.mrf.mxu0
  %1052 = vmatprep.mubr.f32.mxu0 0.0
  %1053 = vmatmul.mubr.f32.gmra.mxu0 %v939
  %v1054 = vpop.f32.mrf.mxu0
  %v1055 = vadd.f32 0.0, %v1054
  %v1056 = vpop.f32.mrf.mxu0
  %1057 = vmatprep.mubr.f32.mxu0 0.0
  %1058 = vmatmul.mubr.f32.gmra.mxu0 %v940
  %v1059 = vpop.f32.mrf.mxu0
  %v1060 = vadd.f32 0.0, %v1059
  %v1061 = vpop.f32.mrf.mxu0
  %1062 = vmatprep.mubr.f32.mxu0 0.0
  %1063 = vmatmul.mubr.f32.gmra.mxu0 %v941
  %v1064 = vpop.f32.mrf.mxu0
  %v1065 = vadd.f32 0.0, %v1064
  %v1066 = vpop.f32.mrf.mxu0
  %1067 = vmatprep.mubr.f32.mxu0 0.0
  %1068 = vmatmul.mubr.f32.gmra.mxu0 %v942
  %v1069 = vpop.f32.mrf.mxu0
  %v1070 = vadd.f32 0.0, %v1069
  %v1071 = vpop.f32.mrf.mxu0
  %1072 = vmatprep.mubr.f32.mxu0 0.0
  %1073 = vmatmul.mubr.f32.gmra.mxu0 %v943
  %v1074 = vpop.f32.mrf.mxu0
  %v1075 = vadd.f32 0.0, %v1074
  %v1076 = vpop.f32.mrf.mxu0
  %1077 = vmatprep.mubr.f32.mxu0 0.0
  %1078 = vmatmul.mubr.f32.gmra.mxu0 %v944
  %v1079 = vpop.f32.mrf.mxu0
  %v1080 = vadd.f32 0.0, %v1079
  %v1081 = vpop.f32.mrf.mxu0
  %1082 = vmatprep.mubr.f32.mxu0 0.0
  %1083 = vmatmul.mubr.f32.gmra.mxu0 %v945
  %v1084 = vpop.f32.mrf.mxu0
  %v1085 = vadd.f32 0.0, %v1084
  %v1086 = vpop.f32.mrf.mxu0
  %1087 = vmatprep.mubr.f32.mxu0 0.0
  %1088 = vmatmul.mubr.f32.gmra.mxu0 %v946
  %v1089 = vpop.f32.mrf.mxu0
  %v1090 = vadd.f32 0.0, %v1089
  %v1091 = vpop.f32.mrf.mxu0
  %1092 = vmatprep.mubr.f32.mxu0 0.0
  %1093 = vmatmul.mubr.f32.gmra.mxu0 %v947
  %v1094 = vpop.f32.mrf.mxu0
  %v1095 = vadd.f32 0.0, %v1094
  %v1096 = vpop.f32.mrf.mxu0
  %1097 = vmatprep.mubr.f32.mxu0 0.0
  %1098 = vmatmul.mubr.f32.gmra.mxu0 %v948
  %v1099 = vpop.f32.mrf.mxu0
  %v1100 = vadd.f32 0.0, %v1099
  %v1101 = vpop.f32.mrf.mxu0
  %1102 = vmatprep.mubr.f32.mxu0 0.0
  %1103 = vmatmul.mubr.f32.gmra.mxu0 %v949
  %v1104 = vpop.f32.mrf.mxu0
  %v1105 = vadd.f32 0.0, %v1104
  %v1106 = vpop.f32.mrf.mxu0
  %1107 = vmatprep.mubr.f32.mxu0 0.0
  %1108 = vmatmul.mubr.f32.gmra.mxu0 %v950
  %v1109 = vpop.f32.mrf.mxu0
  %v1110 = vadd.f32 0.0, %v1109
  %v1111 = vpop.f32.mrf.mxu0
  %1112 = vdwg.mxu0
  %1113 = vmatprep.subr.mxu0 0.0
  %1114 = vmatpush1.msra.mxu0 %v934
  %1115 = vmatprep.subr.mxu0 0.0
  %1116 = vmatpush1.msra.mxu0 %v933
  %1117 = vmatprep.subr.mxu0 0.0
  %1118 = vmatpush1.msra.mxu0 %v932
  %1119 = vmatprep.subr.mxu0 0.0
  %1120 = vmatpush1.msra.mxu0 %v931
  %1121 = vmatprep.subr.mxu0 0.0
  %1122 = vmatpush1.msra.mxu0 %v930
  %1123 = vmatprep.subr.mxu0 0.0
  %1124 = vmatpush1.msra.mxu0 %v929
  %1125 = vmatprep.subr.mxu0 0.0
  %1126 = vmatpush1.msra.mxu0 %v928
  %1127 = vmatprep.subr.mxu0 0.0
  %1128 = vmatpush1.msra.mxu0 %v927
  %1129 = vmatprep.subr.mxu0 0.0
  %1130 = vmatpush1.msra.mxu0 %v926
  %1131 = vmatprep.subr.mxu0 0.0
  %1132 = vmatpush1.msra.mxu0 %v925
  %1133 = vmatprep.subr.mxu0 0.0
  %1134 = vmatpush1.msra.mxu0 %v924
  %1135 = vmatprep.subr.mxu0 0.0
  %1136 = vmatpush1.msra.mxu0 %v923
  %1137 = vmatprep.subr.mxu0 0.0
  %1138 = vmatpush1.msra.mxu0 %v922
  %1139 = vmatprep.subr.mxu0 0.0
  %1140 = vmatpush1.msra.mxu0 %v921
  %1141 = vmatprep.subr.mxu0 0.0
  %1142 = vmatpush1.msra.mxu0 %v920
  %1143 = vmatprep.subr.mxu0 0.0
  %1144 = vmatpush1.msra.mxu0 %v919
  %1145 = vmatprep.subr.mxu0 0.0
  %1146 = vmatpush2.msra.mxu0 0.0
  %1147 = vmatprep.subr.mxu0 0.0
  %1148 = vmatpush2.msra.mxu0 0.0
  %1149 = vmatprep.subr.mxu0 0.0
  %1150 = vmatpush2.msra.mxu0 0.0
  %1151 = vmatprep.subr.mxu0 0.0
  %1152 = vmatpush2.msra.mxu0 0.0
  %1153 = vmatprep.subr.mxu0 0.0
  %1154 = vmatpush2.msra.mxu0 0.0
  %1155 = vmatprep.subr.mxu0 0.0
  %1156 = vmatpush2.msra.mxu0 0.0
  %1157 = vmatprep.subr.mxu0 0.0
  %1158 = vmatpush2.msra.mxu0 0.0
  %1159 = vmatprep.subr.mxu0 0.0
  %1160 = vmatpush2.msra.mxu0 0.0
  %1161 = vmatprep.subr.mxu0 0.0
  %1162 = vmatpush2.msra.mxu0 0.0
  %1163 = vmatprep.subr.mxu0 0.0
  %1164 = vmatpush2.msra.mxu0 0.0
  %1165 = vmatprep.subr.mxu0 0.0
  %1166 = vmatpush2.msra.mxu0 0.0
  %1167 = vmatprep.subr.mxu0 0.0
  %1168 = vmatpush2.msra.mxu0 0.0
  %1169 = vmatprep.subr.mxu0 0.0
  %1170 = vmatpush2.msra.mxu0 0.0
  %1171 = vmatprep.subr.mxu0 0.0
  %1172 = vmatpush2.msra.mxu0 0.0
  %1173 = vmatprep.subr.mxu0 0.0
  %1174 = vmatpush2.msra.mxu0 0.0
  %1175 = vmatprep.subr.mxu0 0.0
  %1176 = vmatpush2.msra.mxu0 0.0
  %1177 = vmatprep.mubr.f32.mxu0 0.0
  %1178 = vmatmul.mubr.f32.gmra.mxu0 %v903
  %v1179 = vpop.f32.mrf.mxu0
  %v1180 = vadd.f32 %v1035, %v1179
  %v1181 = vpop.f32.mrf.mxu0
  %1182 = vmatprep.mubr.f32.mxu0 0.0
  %1183 = vmatmul.mubr.f32.gmra.mxu0 %v904
  %v1184 = vpop.f32.mrf.mxu0
  %v1185 = vadd.f32 %v1040, %v1184
  %v1186 = vpop.f32.mrf.mxu0
  %1187 = vmatprep.mubr.f32.mxu0 0.0
  %1188 = vmatmul.mubr.f32.gmra.mxu0 %v905
  %v1189 = vpop.f32.mrf.mxu0
  %v1190 = vadd.f32 %v1045, %v1189
  %v1191 = vpop.f32.mrf.mxu0
  %1192 = vmatprep.mubr.f32.mxu0 0.0
  %1193 = vmatmul.mubr.f32.gmra.mxu0 %v906
  %v1194 = vpop.f32.mrf.mxu0
  %v1195 = vadd.f32 %v1050, %v1194
  %v1196 = vpop.f32.mrf.mxu0
  %1197 = vmatprep.mubr.f32.mxu0 0.0
  %1198 = vmatmul.mubr.f32.gmra.mxu0 %v907
  %v1199 = vpop.f32.mrf.mxu0
  %v1200 = vadd.f32 %v1055, %v1199
  %v1201 = vpop.f32.mrf.mxu0
  %1202 = vmatprep.mubr.f32.mxu0 0.0
  %1203 = vmatmul.mubr.f32.gmra.mxu0 %v908
  %v1204 = vpop.f32.mrf.mxu0
  %v1205 = vadd.f32 %v1060, %v1204
  %v1206 = vpop.f32.mrf.mxu0
  %1207 = vmatprep.mubr.f32.mxu0 0.0
  %1208 = vmatmul.mubr.f32.gmra.mxu0 %v909
  %v1209 = vpop.f32.mrf.mxu0
  %v1210 = vadd.f32 %v1065, %v1209
  %v1211 = vpop.f32.mrf.mxu0
  %1212 = vmatprep.mubr.f32.mxu0 0.0
  %1213 = vmatmul.mubr.f32.gmra.mxu0 %v910
  %v1214 = vpop.f32.mrf.mxu0
  %v1215 = vadd.f32 %v1070, %v1214
  %v1216 = vpop.f32.mrf.mxu0
  %1217 = vmatprep.mubr.f32.mxu0 0.0
  %1218 = vmatmul.mubr.f32.gmra.mxu0 %v911
  %v1219 = vpop.f32.mrf.mxu0
  %v1220 = vadd.f32 %v1075, %v1219
  %v1221 = vpop.f32.mrf.mxu0
  %1222 = vmatprep.mubr.f32.mxu0 0.0
  %1223 = vmatmul.mubr.f32.gmra.mxu0 %v912
  %v1224 = vpop.f32.mrf.mxu0
  %v1225 = vadd.f32 %v1080, %v1224
  %v1226 = vpop.f32.mrf.mxu0
  %1227 = vmatprep.mubr.f32.mxu0 0.0
  %1228 = vmatmul.mubr.f32.gmra.mxu0 %v913
  %v1229 = vpop.f32.mrf.mxu0
  %v1230 = vadd.f32 %v1085, %v1229
  %v1231 = vpop.f32.mrf.mxu0
  %1232 = vmatprep.mubr.f32.mxu0 0.0
  %1233 = vmatmul.mubr.f32.gmra.mxu0 %v914
  %v1234 = vpop.f32.mrf.mxu0
  %v1235 = vadd.f32 %v1090, %v1234
  %v1236 = vpop.f32.mrf.mxu0
  %1237 = vmatprep.mubr.f32.mxu0 0.0
  %1238 = vmatmul.mubr.f32.gmra.mxu0 %v915
  %v1239 = vpop.f32.mrf.mxu0
  %v1240 = vadd.f32 %v1095, %v1239
  %v1241 = vpop.f32.mrf.mxu0
  %1242 = vmatprep.mubr.f32.mxu0 0.0
  %1243 = vmatmul.mubr.f32.gmra.mxu0 %v916
  %v1244 = vpop.f32.mrf.mxu0
  %v1245 = vadd.f32 %v1100, %v1244
  %v1246 = vpop.f32.mrf.mxu0
  %1247 = vmatprep.mubr.f32.mxu0 0.0
  %1248 = vmatmul.mubr.f32.gmra.mxu0 %v917
  %v1249 = vpop.f32.mrf.mxu0
  %v1250 = vadd.f32 %v1105, %v1249
  %v1251 = vpop.f32.mrf.mxu0
  %1252 = vmatprep.mubr.f32.mxu0 0.0
  %1253 = vmatmul.mubr.f32.gmra.mxu0 %v918
  %v1254 = vpop.f32.mrf.mxu0
  %v1255 = vadd.f32 %v1110, %v1254
  %v1256 = vpop.f32.mrf.mxu0
  %1257 = vdwg.mxu0
  %v1258 = vld [vmem:[#allocation2 + $0x2] sm:$0xff]
  %v1259 = vld [vmem:[#allocation2 + $0xa] sm:$0xff]
  %v1260 = vld [vmem:[#allocation2 + $0x1a] sm:$0xff]
  %v1261 = vld [vmem:[#allocation2 + $0x22] sm:$0xff]
  %v1262 = vld [vmem:[#allocation2 + $0x32] sm:$0xff]
  %v1263 = vld [vmem:[#allocation2 + $0x3a] sm:$0xff]
  %v1264 = vld [vmem:[#allocation2 + $0x4a] sm:$0xff]
  %v1265 = vld [vmem:[#allocation2 + $0x52] sm:$0xff]
  %v1266 = vld [vmem:[#allocation2 + $0x62] sm:$0xff]
  %v1267 = vld [vmem:[#allocation2 + $0x6a] sm:$0xff]
  %v1268 = vld [vmem:[#allocation2 + $0x7a] sm:$0xff]
  %v1269 = vld [vmem:[#allocation2 + $0x82] sm:$0xff]
  %v1270 = vld [vmem:[#allocation2 + $0x92] sm:$0xff]
  %v1271 = vld [vmem:[#allocation2 + $0x9a] sm:$0xff]
  %v1272 = vld [vmem:[#allocation2 + $0xaa] sm:$0xff]
  %v1273 = vld [vmem:[#allocation2 + $0xb2] sm:$0xff]
  %s1274 = scalar_lea.vmem %s2, 256
  %v1275 = vld [vmem:[%s1274] sm:$0xff]
  %v1276 = vld [vmem:[%s1274 + $0x8] sm:$0xff]
  %v1277 = vld [vmem:[%s1274 + $0x10] sm:$0xff]
  %v1278 = vld [vmem:[%s1274 + $0x18] sm:$0xff]
  %v1279 = vld [vmem:[%s1274 + $0x20] sm:$0xff]
  %v1280 = vld [vmem:[%s1274 + $0x28] sm:$0xff]
  %v1281 = vld [vmem:[%s1274 + $0x30] sm:$0xff]
  %v1282 = vld [vmem:[%s1274 + $0x38] sm:$0xff]
  %v1283 = vld [vmem:[%s1274 + $0x40] sm:$0xff]
  %v1284 = vld [vmem:[%s1274 + $0x48] sm:$0xff]
  %v1285 = vld [vmem:[%s1274 + $0x50] sm:$0xff]
  %v1286 = vld [vmem:[%s1274 + $0x58] sm:$0xff]
  %v1287 = vld [vmem:[%s1274 + $0x60] sm:$0xff]
  %v1288 = vld [vmem:[%s1274 + $0x68] sm:$0xff]
  %v1289 = vld [vmem:[%s1274 + $0x70] sm:$0xff]
  %v1290 = vld [vmem:[%s1274 + $0x78] sm:$0xff]
  %1291 = vmatprep.subr.mxu0 0.0
  %1292 = vmatpush1.msra.mxu0 %v1290
  %1293 = vmatprep.subr.mxu0 0.0
  %1294 = vmatpush1.msra.mxu0 %v1289
  %1295 = vmatprep.subr.mxu0 0.0
  %1296 = vmatpush1.msra.mxu0 %v1288
  %1297 = vmatprep.subr.mxu0 0.0
  %1298 = vmatpush1.msra.mxu0 %v1287
  %1299 = vmatprep.subr.mxu0 0.0
  %1300 = vmatpush1.msra.mxu0 %v1286
  %1301 = vmatprep.subr.mxu0 0.0
  %1302 = vmatpush1.msra.mxu0 %v1285
  %1303 = vmatprep.subr.mxu0 0.0
  %1304 = vmatpush1.msra.mxu0 %v1284
  %1305 = vmatprep.subr.mxu0 0.0
  %1306 = vmatpush1.msra.mxu0 %v1283
  %1307 = vmatprep.subr.mxu0 0.0
  %1308 = vmatpush1.msra.mxu0 %v1282
  %1309 = vmatprep.subr.mxu0 0.0
  %1310 = vmatpush1.msra.mxu0 %v1281
  %1311 = vmatprep.subr.mxu0 0.0
  %1312 = vmatpush1.msra.mxu0 %v1280
  %1313 = vmatprep.subr.mxu0 0.0
  %1314 = vmatpush1.msra.mxu0 %v1279
  %1315 = vmatprep.subr.mxu0 0.0
  %1316 = vmatpush1.msra.mxu0 %v1278
  %1317 = vmatprep.subr.mxu0 0.0
  %1318 = vmatpush1.msra.mxu0 %v1277
  %1319 = vmatprep.subr.mxu0 0.0
  %1320 = vmatpush1.msra.mxu0 %v1276
  %1321 = vmatprep.subr.mxu0 0.0
  %1322 = vmatpush1.msra.mxu0 %v1275
  %1323 = vmatprep.subr.mxu0 0.0
  %1324 = vmatpush2.msra.mxu0 0.0
  %1325 = vmatprep.subr.mxu0 0.0
  %1326 = vmatpush2.msra.mxu0 0.0
  %1327 = vmatprep.subr.mxu0 0.0
  %1328 = vmatpush2.msra.mxu0 0.0
  %1329 = vmatprep.subr.mxu0 0.0
  %1330 = vmatpush2.msra.mxu0 0.0
  %1331 = vmatprep.subr.mxu0 0.0
  %1332 = vmatpush2.msra.mxu0 0.0
  %1333 = vmatprep.subr.mxu0 0.0
  %1334 = vmatpush2.msra.mxu0 0.0
  %1335 = vmatprep.subr.mxu0 0.0
  %1336 = vmatpush2.msra.mxu0 0.0
  %1337 = vmatprep.subr.mxu0 0.0
  %1338 = vmatpush2.msra.mxu0 0.0
  %1339 = vmatprep.subr.mxu0 0.0
  %1340 = vmatpush2.msra.mxu0 0.0
  %1341 = vmatprep.subr.mxu0 0.0
  %1342 = vmatpush2.msra.mxu0 0.0
  %1343 = vmatprep.subr.mxu0 0.0
  %1344 = vmatpush2.msra.mxu0 0.0
  %1345 = vmatprep.subr.mxu0 0.0
  %1346 = vmatpush2.msra.mxu0 0.0
  %1347 = vmatprep.subr.mxu0 0.0
  %1348 = vmatpush2.msra.mxu0 0.0
  %1349 = vmatprep.subr.mxu0 0.0
  %1350 = vmatpush2.msra.mxu0 0.0
  %1351 = vmatprep.subr.mxu0 0.0
  %1352 = vmatpush2.msra.mxu0 0.0
  %1353 = vmatprep.subr.mxu0 0.0
  %1354 = vmatpush2.msra.mxu0 0.0
  %1355 = vmatprep.mubr.f32.mxu0 0.0
  %1356 = vmatmul.mubr.f32.gmra.mxu0 %v1258
  %v1357 = vpop.f32.mrf.mxu0
  %v1358 = vadd.f32 0.0, %v1357
  %v1359 = vpop.f32.mrf.mxu0
  %1360 = vmatprep.mubr.f32.mxu0 0.0
  %1361 = vmatmul.mubr.f32.gmra.mxu0 %v1259
  %v1362 = vpop.f32.mrf.mxu0
  %v1363 = vadd.f32 0.0, %v1362
  %v1364 = vpop.f32.mrf.mxu0
  %1365 = vmatprep.mubr.f32.mxu0 0.0
  %1366 = vmatmul.mubr.f32.gmra.mxu0 %v1260
  %v1367 = vpop.f32.mrf.mxu0
  %v1368 = vadd.f32 0.0, %v1367
  %v1369 = vpop.f32.mrf.mxu0
  %1370 = vmatprep.mubr.f32.mxu0 0.0
  %1371 = vmatmul.mubr.f32.gmra.mxu0 %v1261
  %v1372 = vpop.f32.mrf.mxu0
  %v1373 = vadd.f32 0.0, %v1372
  %v1374 = vpop.f32.mrf.mxu0
  %1375 = vmatprep.mubr.f32.mxu0 0.0
  %1376 = vmatmul.mubr.f32.gmra.mxu0 %v1262
  %v1377 = vpop.f32.mrf.mxu0
  %v1378 = vadd.f32 0.0, %v1377
  %v1379 = vpop.f32.mrf.mxu0
  %1380 = vmatprep.mubr.f32.mxu0 0.0
  %1381 = vmatmul.mubr.f32.gmra.mxu0 %v1263
  %v1382 = vpop.f32.mrf.mxu0
  %v1383 = vadd.f32 0.0, %v1382
  %v1384 = vpop.f32.mrf.mxu0
  %1385 = vmatprep.mubr.f32.mxu0 0.0
  %1386 = vmatmul.mubr.f32.gmra.mxu0 %v1264
  %v1387 = vpop.f32.mrf.mxu0
  %v1388 = vadd.f32 0.0, %v1387
  %v1389 = vpop.f32.mrf.mxu0
  %1390 = vmatprep.mubr.f32.mxu0 0.0
  %1391 = vmatmul.mubr.f32.gmra.mxu0 %v1265
  %v1392 = vpop.f32.mrf.mxu0
  %v1393 = vadd.f32 0.0, %v1392
  %v1394 = vpop.f32.mrf.mxu0
  %1395 = vmatprep.mubr.f32.mxu0 0.0
  %1396 = vmatmul.mubr.f32.gmra.mxu0 %v1266
  %v1397 = vpop.f32.mrf.mxu0
  %v1398 = vadd.f32 0.0, %v1397
  %v1399 = vpop.f32.mrf.mxu0
  %1400 = vmatprep.mubr.f32.mxu0 0.0
  %1401 = vmatmul.mubr.f32.gmra.mxu0 %v1267
  %v1402 = vpop.f32.mrf.mxu0
  %v1403 = vadd.f32 0.0, %v1402
  %v1404 = vpop.f32.mrf.mxu0
  %1405 = vmatprep.mubr.f32.mxu0 0.0
  %1406 = vmatmul.mubr.f32.gmra.mxu0 %v1268
  %v1407 = vpop.f32.mrf.mxu0
  %v1408 = vadd.f32 0.0, %v1407
  %v1409 = vpop.f32.mrf.mxu0
  %1410 = vmatprep.mubr.f32.mxu0 0.0
  %1411 = vmatmul.mubr.f32.gmra.mxu0 %v1269
  %v1412 = vpop.f32.mrf.mxu0
  %v1413 = vadd.f32 0.0, %v1412
  %v1414 = vpop.f32.mrf.mxu0
  %1415 = vmatprep.mubr.f32.mxu0 0.0
  %1416 = vmatmul.mubr.f32.gmra.mxu0 %v1270
  %v1417 = vpop.f32.mrf.mxu0
  %v1418 = vadd.f32 0.0, %v1417
  %v1419 = vpop.f32.mrf.mxu0
  %1420 = vmatprep.mubr.f32.mxu0 0.0
  %1421 = vmatmul.mubr.f32.gmra.mxu0 %v1271
  %v1422 = vpop.f32.mrf.mxu0
  %v1423 = vadd.f32 0.0, %v1422
  %v1424 = vpop.f32.mrf.mxu0
  %1425 = vmatprep.mubr.f32.mxu0 0.0
  %1426 = vmatmul.mubr.f32.gmra.mxu0 %v1272
  %v1427 = vpop.f32.mrf.mxu0
  %v1428 = vadd.f32 0.0, %v1427
  %v1429 = vpop.f32.mrf.mxu0
  %1430 = vmatprep.mubr.f32.mxu0 0.0
  %1431 = vmatmul.mubr.f32.gmra.mxu0 %v1273
  %v1432 = vpop.f32.mrf.mxu0
  %v1433 = vadd.f32 0.0, %v1432
  %v1434 = vpop.f32.mrf.mxu0
  %1435 = vdwg.mxu0
  %v1436 = vadd.f32 %v1180, %v1358
  %v1437 = vadd.f32 %v1185, %v1363
  %v1438 = vadd.f32 %v1190, %v1368
  %v1439 = vadd.f32 %v1195, %v1373
  %v1440 = vadd.f32 %v1200, %v1378
  %v1441 = vadd.f32 %v1205, %v1383
  %v1442 = vadd.f32 %v1210, %v1388
  %v1443 = vadd.f32 %v1215, %v1393
  %v1444 = vadd.f32 %v1220, %v1398
  %v1445 = vadd.f32 %v1225, %v1403
  %v1446 = vadd.f32 %v1230, %v1408
  %v1447 = vadd.f32 %v1235, %v1413
  %v1448 = vadd.f32 %v1240, %v1418
  %v1449 = vadd.f32 %v1245, %v1423
  %v1450 = vadd.f32 %v1250, %v1428
  %v1451 = vadd.f32 %v1255, %v1433
  %v1452 = vld [vmem:[%s6] sm:$0x1]
  %v1453 = vld [vmem:[%s7] sm:$0x1]
  %v1454 = vadd.f32 %v1436, %v1437
  %v1455 = vadd.f32 %v1454, %v1438
  %v1456 = vadd.f32 %v1455, %v1439
  %v1457 = vadd.f32 %v1456, %v1440
  %v1458 = vadd.f32 %v1457, %v1441
  %v1459 = vadd.f32 %v1458, %v1442
  %v1460 = vadd.f32 %v1459, %v1443
  %v1461 = vadd.f32 %v1460, %v1444
  %v1462 = vadd.f32 %v1461, %v1445
  %v1463 = vadd.f32 %v1462, %v1446
  %v1464 = vadd.f32 %v1463, %v1447
  %v1465 = vadd.f32 %v1464, %v1448
  %v1466 = vadd.f32 %v1465, %v1449
  %v1467 = vadd.f32 %v1466, %v1450
  %v1468 = vadd.f32 %v1467, %v1451
  %v1469 = vrot.slane %v1468, 4
  %v1470 = vadd.f32 %v1468, %v1469
  %v1471 = vrot.slane %v1470, 2
  %v1472 = vadd.f32 %v1470, %v1471
  %v1473 = vrot.slane %v1472, 1
  %v1474 = vadd.f32 %v1472, %v1473
  %v1475 = vmul.f32 %v1436, %v1436
  %v1476 = vmul.f32 %v1437, %v1437
  %v1477 = vmul.f32 %v1438, %v1438
  %v1478 = vmul.f32 %v1439, %v1439
  %v1479 = vmul.f32 %v1440, %v1440
  %v1480 = vmul.f32 %v1441, %v1441
  %v1481 = vmul.f32 %v1442, %v1442
  %v1482 = vmul.f32 %v1443, %v1443
  %v1483 = vmul.f32 %v1444, %v1444
  %v1484 = vmul.f32 %v1445, %v1445
  %v1485 = vmul.f32 %v1446, %v1446
  %v1486 = vmul.f32 %v1447, %v1447
  %v1487 = vmul.f32 %v1448, %v1448
  %v1488 = vmul.f32 %v1449, %v1449
  %v1489 = vmul.f32 %v1450, %v1450
  %v1490 = vmul.f32 %v1451, %v1451
  %v1491 = vadd.f32 %v1475, %v1476
  %v1492 = vadd.f32 %v1491, %v1477
  %v1493 = vadd.f32 %v1492, %v1478
  %v1494 = vadd.f32 %v1493, %v1479
  %v1495 = vadd.f32 %v1494, %v1480
  %v1496 = vadd.f32 %v1495, %v1481
  %v1497 = vadd.f32 %v1496, %v1482
  %v1498 = vadd.f32 %v1497, %v1483
  %v1499 = vadd.f32 %v1498, %v1484
  %v1500 = vadd.f32 %v1499, %v1485
  %v1501 = vadd.f32 %v1500, %v1486
  %v1502 = vadd.f32 %v1501, %v1487
  %v1503 = vadd.f32 %v1502, %v1488
  %v1504 = vadd.f32 %v1503, %v1489
  %v1505 = vadd.f32 %v1504, %v1490
  %v1506 = vrot.slane %v1505, 4
  %v1507 = vadd.f32 %v1505, %v1506
  %v1508 = vrot.slane %v1507, 2
  %v1509 = vadd.f32 %v1507, %v1508
  %v1510 = vrot.slane %v1509, 1
  %v1511 = vadd.f32 %v1509, %v1510
  %v1512 = vsel %vm694, %v1474, %v1511
  %v1513 = vld [vmem:[%s3] sm:$0xff]
  %v1514 = vld [vmem:[%s3 + $0x8] sm:$0xff]
  %v1515 = vld [vmem:[%s3 + $0x10] sm:$0xff]
  %v1516 = vld [vmem:[%s3 + $0x18] sm:$0xff]
  %v1517 = vld [vmem:[%s3 + $0x20] sm:$0xff]
  %v1518 = vld [vmem:[%s3 + $0x28] sm:$0xff]
  %v1519 = vld [vmem:[%s3 + $0x30] sm:$0xff]
  %v1520 = vld [vmem:[%s3 + $0x38] sm:$0xff]
  %v1521 = vld [vmem:[%s3 + $0x40] sm:$0xff]
  %v1522 = vld [vmem:[%s3 + $0x48] sm:$0xff]
  %v1523 = vld [vmem:[%s3 + $0x50] sm:$0xff]
  %v1524 = vld [vmem:[%s3 + $0x58] sm:$0xff]
  %v1525 = vld [vmem:[%s3 + $0x60] sm:$0xff]
  %v1526 = vld [vmem:[%s3 + $0x68] sm:$0xff]
  %v1527 = vld [vmem:[%s3 + $0x70] sm:$0xff]
  %v1528 = vld [vmem:[%s3 + $0x78] sm:$0xff]
  %1529 = vmatprep.subr.mxu0 0.0
  %1530 = vmatpush1.msra.mxu0 %v1528
  %1531 = vmatprep.subr.mxu0 0.0
  %1532 = vmatpush1.msra.mxu0 %v1527
  %1533 = vmatprep.subr.mxu0 0.0
  %1534 = vmatpush1.msra.mxu0 %v1526
  %1535 = vmatprep.subr.mxu0 0.0
  %1536 = vmatpush1.msra.mxu0 %v1525
  %1537 = vmatprep.subr.mxu0 0.0
  %1538 = vmatpush1.msra.mxu0 %v1524
  %1539 = vmatprep.subr.mxu0 0.0
  %1540 = vmatpush1.msra.mxu0 %v1523
  %1541 = vmatprep.subr.mxu0 0.0
  %1542 = vmatpush1.msra.mxu0 %v1522
  %1543 = vmatprep.subr.mxu0 0.0
  %1544 = vmatpush1.msra.mxu0 %v1521
  %1545 = vmatprep.subr.mxu0 0.0
  %1546 = vmatpush1.msra.mxu0 %v1520
  %1547 = vmatprep.subr.mxu0 0.0
  %1548 = vmatpush1.msra.mxu0 %v1519
  %1549 = vmatprep.subr.mxu0 0.0
  %1550 = vmatpush1.msra.mxu0 %v1518
  %1551 = vmatprep.subr.mxu0 0.0
  %1552 = vmatpush1.msra.mxu0 %v1517
  %1553 = vmatprep.subr.mxu0 0.0
  %1554 = vmatpush1.msra.mxu0 %v1516
  %1555 = vmatprep.subr.mxu0 0.0
  %1556 = vmatpush1.msra.mxu0 %v1515
  %1557 = vmatprep.subr.mxu0 0.0
  %1558 = vmatpush1.msra.mxu0 %v1514
  %1559 = vmatprep.subr.mxu0 0.0
  %1560 = vmatpush1.msra.mxu0 %v1513
  %1561 = vmatprep.subr.mxu0 0.0
  %1562 = vmatpush2.msra.mxu0 0.0
  %1563 = vmatprep.subr.mxu0 0.0
  %1564 = vmatpush2.msra.mxu0 0.0
  %1565 = vmatprep.subr.mxu0 0.0
  %1566 = vmatpush2.msra.mxu0 0.0
  %1567 = vmatprep.subr.mxu0 0.0
  %1568 = vmatpush2.msra.mxu0 0.0
  %1569 = vmatprep.subr.mxu0 0.0
  %1570 = vmatpush2.msra.mxu0 0.0
  %1571 = vmatprep.subr.mxu0 0.0
  %1572 = vmatpush2.msra.mxu0 0.0
  %1573 = vmatprep.subr.mxu0 0.0
  %1574 = vmatpush2.msra.mxu0 0.0
  %1575 = vmatprep.subr.mxu0 0.0
  %1576 = vmatpush2.msra.mxu0 0.0
  %1577 = vmatprep.subr.mxu0 0.0
  %1578 = vmatpush2.msra.mxu0 0.0
  %1579 = vmatprep.subr.mxu0 0.0
  %1580 = vmatpush2.msra.mxu0 0.0
  %1581 = vmatprep.subr.mxu0 0.0
  %1582 = vmatpush2.msra.mxu0 0.0
  %1583 = vmatprep.subr.mxu0 0.0
  %1584 = vmatpush2.msra.mxu0 0.0
  %1585 = vmatprep.subr.mxu0 0.0
  %1586 = vmatpush2.msra.mxu0 0.0
  %1587 = vmatprep.subr.mxu0 0.0
  %1588 = vmatpush2.msra.mxu0 0.0
  %1589 = vmatprep.subr.mxu0 0.0
  %1590 = vmatpush2.msra.mxu0 0.0
  %1591 = vmatprep.subr.mxu0 0.0
  %1592 = vmatpush2.msra.mxu0 0.0
  %1593 = vmatprep.mubr.f32.mxu0 0.0
  %1594 = vmatmul.mubr.f32.gmra.mxu0 %v1512
  %v1595 = vpop.f32.mrf.mxu0
  %v1596 = vadd.f32 0.0, %v1595
  %v1597 = vpop.f32.mrf.mxu0
  %1598 = vdwg.mxu0
  %v1599 = vmul.f32 %v1596, %v1596
  %v1601 = vrot.slane %v1599, 7
  %v1603 = vsub.f32 %v1596, %v1601
  %v1604 = vlaneseq
  %v1605 = vshrl.u32 %v1604, 7
  %v1606 = vsub.s32 0, %v1605
  %v1607 = vrot.slane %v1596, %v1606
  %v1608 = vsub.f32 %v1436, %v1607
  %v1609 = vsub.f32 %v1437, %v1607
  %v1610 = vsub.f32 %v1438, %v1607
  %v1611 = vsub.f32 %v1439, %v1607
  %v1612 = vsub.f32 %v1440, %v1607
  %v1613 = vsub.f32 %v1441, %v1607
  %v1614 = vsub.f32 %v1442, %v1607
  %v1615 = vsub.f32 %v1443, %v1607
  %v1616 = vsub.f32 %v1444, %v1607
  %v1617 = vsub.f32 %v1445, %v1607
  %v1618 = vsub.f32 %v1446, %v1607
  %v1619 = vsub.f32 %v1447, %v1607
  %v1620 = vsub.f32 %v1448, %v1607
  %v1621 = vsub.f32 %v1449, %v1607
  %v1622 = vsub.f32 %v1450, %v1607
  %v1623 = vsub.f32 %v1451, %v1607
  %v1624 = vadd.f32 %v1603, 1e-05
  %v1625 = vrsqrt.pop %v1624
  %v1628 = vunpack.c.l.s4 1966171168
  %v1629 = vunpack.c.0.s8 %v1628
  %v1630 = vlaneseq
  %v1631 = vshrl.u32 %v1630, 7
  %v1632 = vsub.s32 %v1629, %v1631
  %v1633 = vrot.slane %v1625, %v1632
  %v1634 = vcombine.high %v1633, %v1633
  %v1636 = vunpack.c.l.s4 1966171168
  %v1637 = vunpack.c.0.s8 %v1636
  %v1638 = vlaneseq
  %v1639 = vshrl.u32 %v1638, 7
  %v1640 = vsub.s32 %v1637, %v1639
  %v1641 = vrot.slane %v1634, %v1640
  %v1643 = vmul.f32 %v1452, %v1641
  %v1645 = vlaneseq
  %v1646 = vshrl.u32 %v1645, 7
  %v1647 = vsub.s32 0, %v1646
  %v1648 = vrot.slane %v1643, %v1647
  %v1650 = vmul.f32 %v1608, %v1648
  %v1651 = vmul.f32 %v1609, %v1648
  %v1652 = vmul.f32 %v1610, %v1648
  %v1653 = vmul.f32 %v1611, %v1648
  %v1654 = vmul.f32 %v1612, %v1648
  %v1655 = vmul.f32 %v1613, %v1648
  %v1656 = vmul.f32 %v1614, %v1648
  %v1657 = vmul.f32 %v1615, %v1648
  %v1658 = vmul.f32 %v1616, %v1648
  %v1659 = vmul.f32 %v1617, %v1648
  %v1660 = vmul.f32 %v1618, %v1648
  %v1661 = vmul.f32 %v1619, %v1648
  %v1662 = vmul.f32 %v1620, %v1648
  %v1663 = vmul.f32 %v1621, %v1648
  %v1664 = vmul.f32 %v1622, %v1648
  %v1665 = vmul.f32 %v1623, %v1648
  %v1667 = vlaneseq
  %v1668 = vshrl.u32 %v1667, 7
  %v1669 = vsub.s32 0, %v1668
  %v1670 = vrot.slane %v1453, %v1669
  %v1672 = vadd.f32 %v1650, %v1670
  %v1673 = vadd.f32 %v1651, %v1670
  %v1674 = vadd.f32 %v1652, %v1670
  %v1675 = vadd.f32 %v1653, %v1670
  %v1676 = vadd.f32 %v1654, %v1670
  %v1677 = vadd.f32 %v1655, %v1670
  %v1678 = vadd.f32 %v1656, %v1670
  %v1679 = vadd.f32 %v1657, %v1670
  %v1680 = vadd.f32 %v1658, %v1670
  %v1681 = vadd.f32 %v1659, %v1670
  %v1682 = vadd.f32 %v1660, %v1670
  %v1683 = vadd.f32 %v1661, %v1670
  %v1684 = vadd.f32 %v1662, %v1670
  %v1685 = vadd.f32 %v1663, %v1670
  %v1686 = vadd.f32 %v1664, %v1670
  %v1687 = vadd.f32 %v1665, %v1670
  %v1688 = vld [vmem:[%s0] sm:$0xff]
  %v1689 = vld [vmem:[%s0 + $0x8] sm:$0xff]
  %v1690 = vld [vmem:[%s0 + $0x10] sm:$0xff]
  %v1691 = vld [vmem:[%s0 + $0x18] sm:$0xff]
  %v1692 = vld [vmem:[%s0 + $0x20] sm:$0xff]
  %v1693 = vld [vmem:[%s0 + $0x28] sm:$0xff]
  %v1694 = vld [vmem:[%s0 + $0x30] sm:$0xff]
  %v1695 = vld [vmem:[%s0 + $0x38] sm:$0xff]
  %v1696 = vld [vmem:[%s0 + $0x40] sm:$0xff]
  %v1697 = vld [vmem:[%s0 + $0x48] sm:$0xff]
  %v1698 = vld [vmem:[%s0 + $0x50] sm:$0xff]
  %v1699 = vld [vmem:[%s0 + $0x58] sm:$0xff]
  %v1700 = vld [vmem:[%s0 + $0x60] sm:$0xff]
  %v1701 = vld [vmem:[%s0 + $0x68] sm:$0xff]
  %v1702 = vld [vmem:[%s0 + $0x70] sm:$0xff]
  %v1703 = vld [vmem:[%s0 + $0x78] sm:$0xff]
  %v1704 = vadd.f32 %v1672, %v1688
  %v1705 = vadd.f32 %v1673, %v1689
  %v1706 = vadd.f32 %v1674, %v1690
  %v1707 = vadd.f32 %v1675, %v1691
  %v1708 = vadd.f32 %v1676, %v1692
  %v1709 = vadd.f32 %v1677, %v1693
  %v1710 = vadd.f32 %v1678, %v1694
  %v1711 = vadd.f32 %v1679, %v1695
  %v1712 = vadd.f32 %v1680, %v1696
  %v1713 = vadd.f32 %v1681, %v1697
  %v1714 = vadd.f32 %v1682, %v1698
  %v1715 = vadd.f32 %v1683, %v1699
  %v1716 = vadd.f32 %v1684, %v1700
  %v1717 = vadd.f32 %v1685, %v1701
  %v1718 = vadd.f32 %v1686, %v1702
  %v1719 = vadd.f32 %v1687, %v1703
  %v1720 = vmax.f32 %v1704, 0.0
  %v1721 = vmax.f32 %v1705, 0.0
  %v1722 = vmax.f32 %v1706, 0.0
  %v1723 = vmax.f32 %v1707, 0.0
  %v1724 = vmax.f32 %v1708, 0.0
  %v1725 = vmax.f32 %v1709, 0.0
  %v1726 = vmax.f32 %v1710, 0.0
  %v1727 = vmax.f32 %v1711, 0.0
  %v1728 = vmax.f32 %v1712, 0.0
  %v1729 = vmax.f32 %v1713, 0.0
  %v1730 = vmax.f32 %v1714, 0.0
  %v1731 = vmax.f32 %v1715, 0.0
  %v1732 = vmax.f32 %v1716, 0.0
  %v1733 = vmax.f32 %v1717, 0.0
  %v1734 = vmax.f32 %v1718, 0.0
  %v1735 = vmax.f32 %v1719, 0.0
  %1736 = vst [vmem:[%s8] sm:$0xff] %v1720
  %1737 = vst [vmem:[%s8 + $0x8] sm:$0xff] %v1721
  %1738 = vst [vmem:[%s8 + $0x10] sm:$0xff] %v1722
  %1739 = vst [vmem:[%s8 + $0x18] sm:$0xff] %v1723
  %1740 = vst [vmem:[%s8 + $0x20] sm:$0xff] %v1724
  %1741 = vst [vmem:[%s8 + $0x28] sm:$0xff] %v1725
  %1742 = vst [vmem:[%s8 + $0x30] sm:$0xff] %v1726
  %1743 = vst [vmem:[%s8 + $0x38] sm:$0xff] %v1727
  %1744 = vst [vmem:[%s8 + $0x40] sm:$0xff] %v1728
  %1745 = vst [vmem:[%s8 + $0x48] sm:$0xff] %v1729
  %1746 = vst [vmem:[%s8 + $0x50] sm:$0xff] %v1730
  %1747 = vst [vmem:[%s8 + $0x58] sm:$0xff] %v1731
  %1748 = vst [vmem:[%s8 + $0x60] sm:$0xff] %v1732
  %1749 = vst [vmem:[%s8 + $0x68] sm:$0xff] %v1733
  %1750 = vst [vmem:[%s8 + $0x70] sm:$0xff] %v1734
  %1751 = vst [vmem:[%s8 + $0x78] sm:$0xff] %v1735
  // Predicated region
  $region34: #{basic_block_nchw.1} parent=0 // pred_check
    _
  $region35: #{basic_block_nchw.1} parent=0 // pred_check_branch
    %1753 = sbr.rel (0) target = $region37
  $region36: #{basic_block_nchw.1} parent=0 // pred_region
    _
  $region37: #{basic_block_nchw.1} parent=0 // pred_fallthru
    _
  // Predicated region
  $region38: #{basic_block_nchw.1} parent=0 // pred_check
    _
  $region39: #{basic_block_nchw.1} parent=0 // pred_check_branch
    %1755 = sbr.rel (0) target = $region41
  $region40: #{basic_block_nchw.1} parent=0 // pred_region
    _
  $region41: #{basic_block_nchw.1} parent=0 // pred_fallthru
    _

</llo_original>
